<compile_context>
chip_gen: v5e
topology: v5e:2x2
jax: 0.10.0
libtpu: 0.0.40
codegen_flags: <defaults>
</compile_context>

<pallas_src>
import functools
import numpy as np

import jax
import jax.numpy as jnp
from jax import lax
from jax.experimental import pallas as pl
from jax.experimental.pallas import tpu as pltpu


# --------------------------------------------------------------------------
# Fused kernel
# --------------------------------------------------------------------------
def _superpixel_kernel(v_ref, seeds_ref,
                       nz_ref, cnt_ref, wy_ref, wx_ref, rv_ref,
                       *, H, W, Hp, centers, spatial_weight, win_half):
    f32 = jnp.float32
    K = len(centers)
    BS = 8                                   # sublane row-block
    nb = Hp // BS
    sw = float(spatial_weight)
    wh = float(win_half)

    v = v_ref[...]                           # (Hp, W) f32

    # ---- stage A: min/max normalisation constants + nonzero count --------
    if Hp != H:                              # row padding (only if H % 8 != 0)
        rmask = lax.broadcasted_iota(jnp.int32, (Hp, W), 0) < H
        mn = jnp.min(jnp.where(rmask, v, jnp.inf))
        mx = jnp.max(jnp.where(rmask, v, -jnp.inf))
    else:
        mn = jnp.min(v)
        mx = jnp.max(v)
    inv_den = 1.0 / (mx - mn + 1e-5)
    vnz = (v != 0.0).astype(f32)             # padded rows are zero -> excluded
    nz_ref[...] = jnp.sum(vnz, keepdims=True).astype(jnp.int32)

    # seed colours from the SMEM scalars (normalized_values[value_map==0] = 1)
    ccs = []
    for k in range(K):
        raw = seeds_ref[k]
        ccs.append(jnp.where(raw == 0.0, 1.0, (raw - mn) * inv_den))

    # ---- block-loop invariants (hoisted) ----------------------------------
    col_i = lax.broadcasted_iota(jnp.int32, (BS, W), 1).astype(f32)   # (8, W)
    sub_i = lax.broadcasted_iota(jnp.int32, (BS, W), 0).astype(f32)   # (8, W)
    uniq_cx = sorted({cx for _, cx in centers})
    uniq_cy = sorted({cy for cy, _ in centers})
    colterms = {cx: sw * (col_i - float(cx)) ** 2 for cx in uniq_cx}

    # RHS of the one-hot matmul: column 0 = ones, column 1 = column index.
    rhs_sel = lax.broadcasted_iota(jnp.int32, (W, 2), 1)
    rhs = jnp.where(rhs_sel == 0, 1.0,
                    lax.broadcasted_iota(jnp.int32, (W, 2), 0).astype(f32))
    # Group-sum matrices: g_sum[k, k*8+s] = 1, g_s[k, k*8+s] = s.
    kk = lax.broadcasted_iota(jnp.int32, (K, K * BS), 0)
    mm = lax.broadcasted_iota(jnp.int32, (K, K * BS), 1)
    in_grp = (mm >= kk * BS) & (mm < (kk + 1) * BS)
    g_sum = in_grp.astype(f32)                                        # (K, K*8)
    g_s = jnp.where(in_grp, (mm - kk * BS).astype(f32), 0.0)          # (K, K*8)

    # ---- stages B + C(pass 1): per-row-block assignment + accumulation ----
    # TODO(synk): cv2.applyColorMap(COLORMAP_HOT) + fast_slic's iterative
    #   k-means have no clean Pallas equivalent; a single nearest-center
    #   assignment over the normalised grayscale intensity is used instead.
    def block_body(b, carry):
        cnt_a, rs_a, cs_a = carry
        r0 = pl.multiple_of(b * BS, BS)
        vb = v_ref[pl.ds(r0, BS), :]                                  # (8, W)
        r0f = (b * BS).astype(f32)
        rowp = sub_i + r0f
        normb = (vb - mn) * inv_den
        normb = jnp.where(vb == 0.0, 1.0, normb)
        m2n = -2.0 * normb
        rowterms = {cy: sw * (rowp - float(cy)) ** 2 for cy in uniq_cy}

        best_d = jnp.full((BS, W), jnp.inf, dtype=f32)
        best_k = jnp.zeros((BS, W), dtype=jnp.int32)
        for k, (cy, cx) in enumerate(centers):
            cc = ccs[k]
            # full dist = (norm-cc)^2 + sw*((r-cy)^2+(c-cx)^2); norm^2 dropped
            d = rowterms[cy] + colterms[cx] + (cc * m2n + cc * cc)
            better = d < best_d
            best_d = jnp.where(better, d, best_d)
            best_k = jnp.where(better, k + 1, best_k)                 # 1..K
        assign = jnp.where(vb != 0.0, best_k, 0)                      # *= valid

        # one-hot (K*8, W) -> MXU: per-(label, sublane) [count, col-sum]
        oh = jnp.concatenate(
            [(assign == (k + 1)).astype(f32) for k in range(K)], axis=0)
        out = jnp.dot(oh, rhs, preferred_element_type=f32)            # (K*8, 2)
        s_a = jnp.dot(g_sum, out, preferred_element_type=f32)         # (K, 2)
        s_b = jnp.dot(g_s, out, preferred_element_type=f32)           # (K, 2)
        cnt_b = s_a[:, 0:1]
        cnt_a = cnt_a + cnt_b
        cs_a = cs_a + s_a[:, 1:2]
        rs_a = rs_a + s_b[:, 0:1] + r0f * cnt_b
        return cnt_a, rs_a, cs_a

    zero_k1 = jnp.zeros((K, 1), f32)
    cnt, rs, cs = lax.fori_loop(0, nb, block_body, (zero_k1, zero_k1, zero_k1))

    # ---- stage C(pass 2): centroids + 10x10 window scoring (separable) ----
    safe = jnp.maximum(cnt, 1.0)
    wy = jnp.floor(rs / safe)                                         # (K, 1)
    wx = jnp.floor(cs / safe)

    r_i = lax.broadcasted_iota(jnp.int32, (K, Hp), 1).astype(f32)
    c_i = lax.broadcasted_iota(jnp.int32, (K, W), 1).astype(f32)
    rm = ((r_i >= wy - wh) & (r_i < wy + wh)).astype(f32)             # (K, Hp)
    cm = ((c_i >= wx - wh) & (c_i < wx + wh)).astype(f32)             # (K, W)
    u1 = jnp.dot(rm, v, preferred_element_type=f32)                   # (K, W)
    u2 = jnp.dot(rm, vnz, preferred_element_type=f32)                 # (K, W)
    msum = jnp.sum(u1 * cm, axis=1, keepdims=True)                    # (K, 1)
    mcnt = jnp.sum(u2 * cm, axis=1, keepdims=True)                    # (K, 1)
    rv = jnp.where(msum > 0.0, msum / jnp.maximum(mcnt, 1.0), 0.0)

    cnt_ref[...] = jnp.floor(cnt + 0.5).astype(jnp.int32)
    wy_ref[...] = wy.astype(jnp.int32)
    wx_ref[...] = wx.astype(jnp.int32)
    rv_ref[...] = rv


def build_superpixel_call(H, W, centers, spatial_weight, num_labels):
    Hp = ((H + 7) // 8) * 8          # row-block loop needs a multiple of 8 rows
    row_pad = Hp - H
    K = num_labels

    kernel = functools.partial(
        _superpixel_kernel, H=H, W=W, Hp=Hp, centers=tuple(centers),
        spatial_weight=float(spatial_weight), win_half=5.0)

    call = pl.pallas_call(
        kernel,
        out_shape=(jax.ShapeDtypeStruct((1, 1), jnp.int32),        # nonzero cnt
                   jax.ShapeDtypeStruct((K, 1), jnp.int32),        # pixel count
                   jax.ShapeDtypeStruct((K, 1), jnp.int32),        # centroid row
                   jax.ShapeDtypeStruct((K, 1), jnp.int32),        # centroid col
                   jax.ShapeDtypeStruct((K, 1), jnp.float32)),     # region value
        in_specs=[pl.BlockSpec(memory_space=pltpu.MemorySpace.VMEM),
                  pl.BlockSpec(memory_space=pltpu.MemorySpace.SMEM)],
        out_specs=(pl.BlockSpec(memory_space=pltpu.MemorySpace.VMEM),) * 5,
    )

    cys = np.array([c[0] for c in centers], dtype=np.int32)
    cxs = np.array([c[1] for c in centers], dtype=np.int32)

    @jax.jit
    def run(value_map):
        vm = value_map.astype(jnp.float32)                 # (H, W), no reshape
        seeds = vm[cys, cxs]                               # 16-elem const gather
        if row_pad:
            vm = jnp.pad(vm, ((0, row_pad), (0, 0)))
        return call(vm, seeds)

    return run


# --------------------------------------------------------------------------
# SuperPixelPolicy (forward pass)
# --------------------------------------------------------------------------
class SuperPixelPolicyPallas:
    def __init__(self, map_size, grid_size=4, compactness=100.0,
                 min_region_pixels=100, top_k=3, sparse_threshold=24 ** 2):
        self.H = self.W = int(map_size)
        self.grid_size = int(grid_size)
        self.region_size = self.H // self.grid_size
        self.num_components = self.grid_size * self.grid_size
        self.compactness = float(compactness)
        self.min_region_pixels = int(min_region_pixels)
        self.top_k = int(top_k)
        self.sparse_threshold = int(sparse_threshold)

        S = self.region_size
        idx = [i * S + S // 2 for i in range(self.grid_size)]
        self.centers = [(cy, cx) for cy in idx for cx in idx]
        # colour channel range ~[0,1] -> SLIC "ruler" scaling
        self.spatial_weight = (self.compactness / 100.0 / S) ** 2

        self._run = build_superpixel_call(self.H, self.W, self.centers,
                                          self.spatial_weight,
                                          self.num_components)

    def reset(self):
        pass

    def __call__(self, full_map, traversible, value_map, collision_map,
                 detected_classes, position, fmm_dist, replan, step,
                 current_episode_id):
        # single fused kernel launch ...
        outs = self._run(jnp.asarray(value_map, jnp.float32))
        # ... and a single host sync; sparse-threshold decision happens here.
        nz, counts, wy, wx, rv = jax.device_get(outs)
        counts, wy, wx, rv = counts[:, 0], wy[:, 0], wx[:, 0], rv[:, 0]

        pos_wp = np.array([int(position[0]), int(position[1])], dtype=np.int32)
        if int(nz[0, 0]) < self.sparse_threshold:
            return pos_wp, 0.0, [pos_wp]

        # TODO(synk): cv2.connectedComponentsWithStats largest-component size
        #   filter is replaced by a total-pixel-count-per-label filter.
        valid = counts >= self.min_region_pixels
        order = [int(i) for i in np.argsort(-rv, kind="stable") if valid[int(i)]]
        if not order:
            return pos_wp, 0.0, [pos_wp]

        top = order[: self.top_k]
        sorted_waypoints = np.stack(
            [np.array([int(wy[i]), int(wx[i])], dtype=np.int32) for i in top])
        sorted_values = [float(rv[i]) for i in top]

        # TODO(synk): WaypointSelector / get_nearest_nonzero_waypoint /
        #   collision-distance reselection are external modules; the
        #   highest-value waypoint is chosen directly.
        return sorted_waypoints[0], sorted_values[0], sorted_waypoints


# --------------------------------------------------------------------------
if __name__ == "__main__":
    key = jax.random.PRNGKey(0)
    H = W = 64

    # Dense value map: a 48x48 block of positive values (> 24**2 nonzeros).
    vals = jax.random.uniform(key, (48, 48), minval=0.1, maxval=1.0,
                              dtype=jnp.float32)
    value_map = jnp.zeros((H, W), jnp.float32).at[8:56, 8:56].set(vals)

    full_map = jnp.zeros((4, H, W), jnp.float32)
    traversible = jnp.ones((H, W), jnp.float32)
    collision_map = jnp.zeros((H, W), jnp.float32)
    fmm_dist = jnp.zeros((H, W), jnp.float32)
    position = (32.0, 32.0)

    policy = SuperPixelPolicyPallas(map_size=H, grid_size=4)

    best_wp, best_val, sorted_wps = policy(
        full_map, traversible, value_map, collision_map,
        detected_classes=None, position=position, fmm_dist=fmm_dist,
        replan=False, step=0, current_episode_id=0)
    jax.block_until_ready((best_wp, sorted_wps))

    # Sparse value map exercises the early-return branch (decided at the
    # single final host sync — no mid-pipeline device_get).
    sparse_map = jnp.zeros((H, W), jnp.float32).at[0:10, 0:10].set(1.0)
    wp2, v2, _ = policy(
        full_map, traversible, sparse_map, collision_map,
        detected_classes=None, position=position, fmm_dist=fmm_dist,
        replan=False, step=1, current_episode_id=0)
    jax.block_until_ready(wp2)

    print("KERNEL_OK")
</pallas_src>

<mosaic_0001>
module attributes {stable_mosaic.version = 11 : i64} {
  func.func @_superpixel_kernel(%arg0: memref<64x64xf32, #tpu.memory_space<vmem>>, %arg1: memref<16xf32, #tpu.memory_space<smem>>, %arg2: memref<1x1xi32, #tpu.memory_space<vmem>>, %arg3: memref<16x1xi32, #tpu.memory_space<vmem>>, %arg4: memref<16x1xi32, #tpu.memory_space<vmem>>, %arg5: memref<16x1xi32, #tpu.memory_space<vmem>>, %arg6: memref<16x1xf32, #tpu.memory_space<vmem>>) attributes {dimension_semantics = [], scalar_prefetch = 0 : i64, scratch_operands = 0 : i64, tpu.core_type = #tpu.core_type<tc>} {
    %c0 = arith.constant 0 : index
    %c0_0 = arith.constant 0 : index
    %0 = vector.load %arg0[%c0, %c0_0] : memref<64x64xf32, #tpu.memory_space<vmem>>, vector<64x64xf32>
    %1 = vector.shape_cast %0 : vector<64x64xf32> to vector<1x64x64xf32>
    %cst = arith.constant dense<0x7F800000> : vector<1xf32>
    %2 = vector.multi_reduction <minimumf>, %1, %cst [1, 2] : vector<1x64x64xf32> to vector<1xf32>
    %3 = vector.shape_cast %2 : vector<1xf32> to vector<1x1x1xf32>
    %4 = vector.extract %3[0, 0, 0] : f32 from vector<1x1x1xf32>
    %5 = vector.shape_cast %0 : vector<64x64xf32> to vector<1x64x64xf32>
    %cst_1 = arith.constant dense<0xFF800000> : vector<1xf32>
    %6 = vector.multi_reduction <maximumf>, %5, %cst_1 [1, 2] : vector<1x64x64xf32> to vector<1xf32>
    %7 = vector.shape_cast %6 : vector<1xf32> to vector<1x1x1xf32>
    %8 = vector.extract %7[0, 0, 0] : f32 from vector<1x1x1xf32>
    %9 = arith.subf %8, %4 : f32
    %cst_2 = arith.constant 9.99999974E-6 : f32
    %10 = arith.addf %9, %cst_2 : f32
    %cst_3 = arith.constant 1.000000e+00 : f32
    %11 = arith.divf %cst_3, %10 : f32
    %cst_4 = arith.constant 0.000000e+00 : f32
    %12 = vector.broadcast %cst_4 : f32 to vector<64x64xf32>
    %13 = arith.cmpf one, %0, %12 : vector<64x64xf32>
    %14 = arith.extui %13 : vector<64x64xi1> to vector<64x64xi32>
    %15 = arith.sitofp %14 : vector<64x64xi32> to vector<64x64xf32>
    %16 = vector.shape_cast %15 : vector<64x64xf32> to vector<1x64x64xf32>
    %cst_5 = arith.constant dense<0.000000e+00> : vector<1xf32>
    %17 = vector.multi_reduction <add>, %16, %cst_5 [1, 2] : vector<1x64x64xf32> to vector<1xf32>
    %18 = vector.shape_cast %17 : vector<1xf32> to vector<1x1x1xf32>
    %19 = vector.extract %18[0, 0, 0] : f32 from vector<1x1x1xf32>
    %20 = vector.broadcast %19 : f32 to vector<1x1xf32>
    %21 = arith.fptosi %20 : vector<1x1xf32> to vector<1x1xi32>
    %c0_6 = arith.constant 0 : index
    %c0_7 = arith.constant 0 : index
    %22 = vector.load %arg2[%c0_6, %c0_7] : memref<1x1xi32, #tpu.memory_space<vmem>>, vector<1x1xi32>
    tpu.vector_store %arg2[%c0_6, %c0_7], %21 {strides = array<i32>} : memref<1x1xi32, #tpu.memory_space<vmem>>, vector<1x1xi32>,
    %c0_8 = arith.constant 0 : index
    %23 = memref.load %arg1[%c0_8] : memref<16xf32, #tpu.memory_space<smem>>
    %cst_9 = arith.constant 0.000000e+00 : f32
    %24 = arith.cmpf oeq, %23, %cst_9 : f32
    %25 = arith.subf %23, %4 : f32
    %26 = arith.mulf %25, %11 : f32
    %cst_10 = arith.constant 1.000000e+00 : f32
    %27 = arith.select %24, %cst_10, %26 : f32
    %c1 = arith.constant 1 : index
    %28 = memref.load %arg1[%c1] : memref<16xf32, #tpu.memory_space<smem>>
    %cst_11 = arith.constant 0.000000e+00 : f32
    %29 = arith.cmpf oeq, %28, %cst_11 : f32
    %30 = arith.subf %28, %4 : f32
    %31 = arith.mulf %30, %11 : f32
    %cst_12 = arith.constant 1.000000e+00 : f32
    %32 = arith.select %29, %cst_12, %31 : f32
    %c2 = arith.constant 2 : index
    %33 = memref.load %arg1[%c2] : memref<16xf32, #tpu.memory_space<smem>>
    %cst_13 = arith.constant 0.000000e+00 : f32
    %34 = arith.cmpf oeq, %33, %cst_13 : f32
    %35 = arith.subf %33, %4 : f32
    %36 = arith.mulf %35, %11 : f32
    %cst_14 = arith.constant 1.000000e+00 : f32
    %37 = arith.select %34, %cst_14, %36 : f32
    %c3 = arith.constant 3 : index
    %38 = memref.load %arg1[%c3] : memref<16xf32, #tpu.memory_space<smem>>
    %cst_15 = arith.constant 0.000000e+00 : f32
    %39 = arith.cmpf oeq, %38, %cst_15 : f32
    %40 = arith.subf %38, %4 : f32
    %41 = arith.mulf %40, %11 : f32
    %cst_16 = arith.constant 1.000000e+00 : f32
    %42 = arith.select %39, %cst_16, %41 : f32
    %c4 = arith.constant 4 : index
    %43 = memref.load %arg1[%c4] : memref<16xf32, #tpu.memory_space<smem>>
    %cst_17 = arith.constant 0.000000e+00 : f32
    %44 = arith.cmpf oeq, %43, %cst_17 : f32
    %45 = arith.subf %43, %4 : f32
    %46 = arith.mulf %45, %11 : f32
    %cst_18 = arith.constant 1.000000e+00 : f32
    %47 = arith.select %44, %cst_18, %46 : f32
    %c5 = arith.constant 5 : index
    %48 = memref.load %arg1[%c5] : memref<16xf32, #tpu.memory_space<smem>>
    %cst_19 = arith.constant 0.000000e+00 : f32
    %49 = arith.cmpf oeq, %48, %cst_19 : f32
    %50 = arith.subf %48, %4 : f32
    %51 = arith.mulf %50, %11 : f32
    %cst_20 = arith.constant 1.000000e+00 : f32
    %52 = arith.select %49, %cst_20, %51 : f32
    %c6 = arith.constant 6 : index
    %53 = memref.load %arg1[%c6] : memref<16xf32, #tpu.memory_space<smem>>
    %cst_21 = arith.constant 0.000000e+00 : f32
    %54 = arith.cmpf oeq, %53, %cst_21 : f32
    %55 = arith.subf %53, %4 : f32
    %56 = arith.mulf %55, %11 : f32
    %cst_22 = arith.constant 1.000000e+00 : f32
    %57 = arith.select %54, %cst_22, %56 : f32
    %c7 = arith.constant 7 : index
    %58 = memref.load %arg1[%c7] : memref<16xf32, #tpu.memory_space<smem>>
    %cst_23 = arith.constant 0.000000e+00 : f32
    %59 = arith.cmpf oeq, %58, %cst_23 : f32
    %60 = arith.subf %58, %4 : f32
    %61 = arith.mulf %60, %11 : f32
    %cst_24 = arith.constant 1.000000e+00 : f32
    %62 = arith.select %59, %cst_24, %61 : f32
    %c8 = arith.constant 8 : index
    %63 = memref.load %arg1[%c8] : memref<16xf32, #tpu.memory_space<smem>>
    %cst_25 = arith.constant 0.000000e+00 : f32
    %64 = arith.cmpf oeq, %63, %cst_25 : f32
    %65 = arith.subf %63, %4 : f32
    %66 = arith.mulf %65, %11 : f32
    %cst_26 = arith.constant 1.000000e+00 : f32
    %67 = arith.select %64, %cst_26, %66 : f32
    %c9 = arith.constant 9 : index
    %68 = memref.load %arg1[%c9] : memref<16xf32, #tpu.memory_space<smem>>
    %cst_27 = arith.constant 0.000000e+00 : f32
    %69 = arith.cmpf oeq, %68, %cst_27 : f32
    %70 = arith.subf %68, %4 : f32
    %71 = arith.mulf %70, %11 : f32
    %cst_28 = arith.constant 1.000000e+00 : f32
    %72 = arith.select %69, %cst_28, %71 : f32
    %c10 = arith.constant 10 : index
    %73 = memref.load %arg1[%c10] : memref<16xf32, #tpu.memory_space<smem>>
    %cst_29 = arith.constant 0.000000e+00 : f32
    %74 = arith.cmpf oeq, %73, %cst_29 : f32
    %75 = arith.subf %73, %4 : f32
    %76 = arith.mulf %75, %11 : f32
    %cst_30 = arith.constant 1.000000e+00 : f32
    %77 = arith.select %74, %cst_30, %76 : f32
    %c11 = arith.constant 11 : index
    %78 = memref.load %arg1[%c11] : memref<16xf32, #tpu.memory_space<smem>>
    %cst_31 = arith.constant 0.000000e+00 : f32
    %79 = arith.cmpf oeq, %78, %cst_31 : f32
    %80 = arith.subf %78, %4 : f32
    %81 = arith.mulf %80, %11 : f32
    %cst_32 = arith.constant 1.000000e+00 : f32
    %82 = arith.select %79, %cst_32, %81 : f32
    %c12 = arith.constant 12 : index
    %83 = memref.load %arg1[%c12] : memref<16xf32, #tpu.memory_space<smem>>
    %cst_33 = arith.constant 0.000000e+00 : f32
    %84 = arith.cmpf oeq, %83, %cst_33 : f32
    %85 = arith.subf %83, %4 : f32
    %86 = arith.mulf %85, %11 : f32
    %cst_34 = arith.constant 1.000000e+00 : f32
    %87 = arith.select %84, %cst_34, %86 : f32
    %c13 = arith.constant 13 : index
    %88 = memref.load %arg1[%c13] : memref<16xf32, #tpu.memory_space<smem>>
    %cst_35 = arith.constant 0.000000e+00 : f32
    %89 = arith.cmpf oeq, %88, %cst_35 : f32
    %90 = arith.subf %88, %4 : f32
    %91 = arith.mulf %90, %11 : f32
    %cst_36 = arith.constant 1.000000e+00 : f32
    %92 = arith.select %89, %cst_36, %91 : f32
    %c14 = arith.constant 14 : index
    %93 = memref.load %arg1[%c14] : memref<16xf32, #tpu.memory_space<smem>>
    %cst_37 = arith.constant 0.000000e+00 : f32
    %94 = arith.cmpf oeq, %93, %cst_37 : f32
    %95 = arith.subf %93, %4 : f32
    %96 = arith.mulf %95, %11 : f32
    %cst_38 = arith.constant 1.000000e+00 : f32
    %97 = arith.select %94, %cst_38, %96 : f32
    %c15 = arith.constant 15 : index
    %98 = memref.load %arg1[%c15] : memref<16xf32, #tpu.memory_space<smem>>
    %cst_39 = arith.constant 0.000000e+00 : f32
    %99 = arith.cmpf oeq, %98, %cst_39 : f32
    %100 = arith.subf %98, %4 : f32
    %101 = arith.mulf %100, %11 : f32
    %cst_40 = arith.constant 1.000000e+00 : f32
    %102 = arith.select %99, %cst_40, %101 : f32
    %103 = tpu.iota {dimensions = array<i32: 1>} : vector<8x64xi32>
    %104 = arith.sitofp %103 : vector<8x64xi32> to vector<8x64xf32>
    %105 = tpu.iota {dimensions = array<i32: 0>} : vector<8x64xi32>
    %106 = arith.sitofp %105 : vector<8x64xi32> to vector<8x64xf32>
    %cst_41 = arith.constant 8.000000e+00 : f32
    %107 = vector.broadcast %cst_41 : f32 to vector<8x64xf32>
    %108 = arith.subf %104, %107 : vector<8x64xf32>
    %109 = arith.mulf %108, %108 : vector<8x64xf32>
    %cst_42 = arith.constant 3.906250e-03 : f32
    %110 = vector.broadcast %cst_42 : f32 to vector<8x64xf32>
    %111 = arith.mulf %110, %109 : vector<8x64xf32>
    %cst_43 = arith.constant 2.400000e+01 : f32
    %112 = vector.broadcast %cst_43 : f32 to vector<8x64xf32>
    %113 = arith.subf %104, %112 : vector<8x64xf32>
    %114 = arith.mulf %113, %113 : vector<8x64xf32>
    %cst_44 = arith.constant 3.906250e-03 : f32
    %115 = vector.broadcast %cst_44 : f32 to vector<8x64xf32>
    %116 = arith.mulf %115, %114 : vector<8x64xf32>
    %cst_45 = arith.constant 4.000000e+01 : f32
    %117 = vector.broadcast %cst_45 : f32 to vector<8x64xf32>
    %118 = arith.subf %104, %117 : vector<8x64xf32>
    %119 = arith.mulf %118, %118 : vector<8x64xf32>
    %cst_46 = arith.constant 3.906250e-03 : f32
    %120 = vector.broadcast %cst_46 : f32 to vector<8x64xf32>
    %121 = arith.mulf %120, %119 : vector<8x64xf32>
    %cst_47 = arith.constant 5.600000e+01 : f32
    %122 = vector.broadcast %cst_47 : f32 to vector<8x64xf32>
    %123 = arith.subf %104, %122 : vector<8x64xf32>
    %124 = arith.mulf %123, %123 : vector<8x64xf32>
    %cst_48 = arith.constant 3.906250e-03 : f32
    %125 = vector.broadcast %cst_48 : f32 to vector<8x64xf32>
    %126 = arith.mulf %125, %124 : vector<8x64xf32>
    %127 = tpu.iota {dimensions = array<i32: 1>} : vector<64x2xi32>
    %c0_i32 = arith.constant 0 : i32
    %128 = vector.broadcast %c0_i32 : i32 to vector<64x2xi32>
    %129 = arith.cmpi eq, %127, %128 : vector<64x2xi32>
    %130 = tpu.iota {dimensions = array<i32: 0>} : vector<64x2xi32>
    %131 = arith.sitofp %130 : vector<64x2xi32> to vector<64x2xf32>
    %cst_49 = arith.constant 1.000000e+00 : f32
    %132 = vector.broadcast %cst_49 : f32 to vector<64x2xf32>
    %133 = arith.select %129, %132, %131 : vector<64x2xi1>, vector<64x2xf32>
    %134 = tpu.iota {dimensions = array<i32: 0>} : vector<16x128xi32>
    %135 = tpu.iota {dimensions = array<i32: 1>} : vector<16x128xi32>
    %c8_i32 = arith.constant 8 : i32
    %136 = vector.broadcast %c8_i32 : i32 to vector<16x128xi32>
    %137 = arith.muli %134, %136 : vector<16x128xi32>
    %138 = arith.cmpi sge, %135, %137 : vector<16x128xi32>
    %c1_i32 = arith.constant 1 : i32
    %139 = vector.broadcast %c1_i32 : i32 to vector<16x128xi32>
    %140 = arith.addi %134, %139 : vector<16x128xi32>
    %c8_i32_50 = arith.constant 8 : i32
    %141 = vector.broadcast %c8_i32_50 : i32 to vector<16x128xi32>
    %142 = arith.muli %140, %141 : vector<16x128xi32>
    %143 = arith.cmpi slt, %135, %142 : vector<16x128xi32>
    %144 = arith.andi %138, %143 : vector<16x128xi1>
    %145 = arith.extui %144 : vector<16x128xi1> to vector<16x128xi32>
    %146 = arith.sitofp %145 : vector<16x128xi32> to vector<16x128xf32>
    %c8_i32_51 = arith.constant 8 : i32
    %147 = vector.broadcast %c8_i32_51 : i32 to vector<16x128xi32>
    %148 = arith.muli %134, %147 : vector<16x128xi32>
    %149 = arith.subi %135, %148 : vector<16x128xi32>
    %150 = arith.sitofp %149 : vector<16x128xi32> to vector<16x128xf32>
    %cst_52 = arith.constant 0.000000e+00 : f32
    %151 = vector.broadcast %cst_52 : f32 to vector<16x128xf32>
    %152 = arith.select %144, %150, %151 : vector<16x128xi1>, vector<16x128xf32>
    %cst_53 = arith.constant 0.000000e+00 : f32
    %153 = vector.broadcast %cst_53 : f32 to vector<16x1xf32>
    %c0_i32_54 = arith.constant 0 : i32
    %c8_i32_55 = arith.constant 8 : i32
    %154 = arith.addi %c0_i32_54, %c8_i32_55 : i32
    %c1_i32_56 = arith.constant 1 : i32
    %155:3 = scf.for %arg7 = %c0_i32_54 to %154 step %c1_i32_56 iter_args(%arg8 = %153, %arg9 = %153, %arg10 = %153) -> (vector<16x1xf32>, vector<16x1xf32>, vector<16x1xf32>)  : i32 {
      %c8_i32_79 = arith.constant 8 : i32
      %213 = arith.muli %arg7, %c8_i32_79 : i32
      %214 = tpu.assume_multiple %213, 8 : i32
      %215 = arith.index_cast %214 : i32 to index
      %c0_80 = arith.constant 0 : index
      %216 = vector.load %arg0[%215, %c0_80] : memref<64x64xf32, #tpu.memory_space<vmem>>, vector<8x64xf32>
      %c8_i32_81 = arith.constant 8 : i32
      %217 = arith.muli %arg7, %c8_i32_81 : i32
      %218 = arith.sitofp %217 : i32 to f32
      %219 = vector.broadcast %218 : f32 to vector<8x64xf32>
      %220 = arith.addf %106, %219 : vector<8x64xf32>
      %221 = vector.broadcast %4 : f32 to vector<8x64xf32>
      %222 = arith.subf %216, %221 : vector<8x64xf32>
      %223 = vector.broadcast %11 : f32 to vector<8x64xf32>
      %224 = arith.mulf %222, %223 : vector<8x64xf32>
      %cst_82 = arith.constant 0.000000e+00 : f32
      %225 = vector.broadcast %cst_82 : f32 to vector<8x64xf32>
      %226 = arith.cmpf oeq, %216, %225 : vector<8x64xf32>
      %cst_83 = arith.constant 1.000000e+00 : f32
      %227 = vector.broadcast %cst_83 : f32 to vector<8x64xf32>
      %228 = arith.select %226, %227, %224 : vector<8x64xi1>, vector<8x64xf32>
      %cst_84 = arith.constant -2.000000e+00 : f32
      %229 = vector.broadcast %cst_84 : f32 to vector<8x64xf32>
      %230 = arith.mulf %229, %228 : vector<8x64xf32>
      %cst_85 = arith.constant 8.000000e+00 : f32
      %231 = vector.broadcast %cst_85 : f32 to vector<8x64xf32>
      %232 = arith.subf %220, %231 : vector<8x64xf32>
      %233 = arith.mulf %232, %232 : vector<8x64xf32>
      %cst_86 = arith.constant 3.906250e-03 : f32
      %234 = vector.broadcast %cst_86 : f32 to vector<8x64xf32>
      %235 = arith.mulf %234, %233 : vector<8x64xf32>
      %cst_87 = arith.constant 2.400000e+01 : f32
      %236 = vector.broadcast %cst_87 : f32 to vector<8x64xf32>
      %237 = arith.subf %220, %236 : vector<8x64xf32>
      %238 = arith.mulf %237, %237 : vector<8x64xf32>
      %cst_88 = arith.constant 3.906250e-03 : f32
      %239 = vector.broadcast %cst_88 : f32 to vector<8x64xf32>
      %240 = arith.mulf %239, %238 : vector<8x64xf32>
      %cst_89 = arith.constant 4.000000e+01 : f32
      %241 = vector.broadcast %cst_89 : f32 to vector<8x64xf32>
      %242 = arith.subf %220, %241 : vector<8x64xf32>
      %243 = arith.mulf %242, %242 : vector<8x64xf32>
      %cst_90 = arith.constant 3.906250e-03 : f32
      %244 = vector.broadcast %cst_90 : f32 to vector<8x64xf32>
      %245 = arith.mulf %244, %243 : vector<8x64xf32>
      %cst_91 = arith.constant 5.600000e+01 : f32
      %246 = vector.broadcast %cst_91 : f32 to vector<8x64xf32>
      %247 = arith.subf %220, %246 : vector<8x64xf32>
      %248 = arith.mulf %247, %247 : vector<8x64xf32>
      %cst_92 = arith.constant 3.906250e-03 : f32
      %249 = vector.broadcast %cst_92 : f32 to vector<8x64xf32>
      %250 = arith.mulf %249, %248 : vector<8x64xf32>
      %cst_93 = arith.constant 0x7F800000 : f32
      %251 = vector.broadcast %cst_93 : f32 to vector<8x64xf32>
      %c0_i32_94 = arith.constant 0 : i32
      %252 = vector.broadcast %c0_i32_94 : i32 to vector<8x64xi32>
      %253 = arith.addf %235, %111 : vector<8x64xf32>
      %254 = vector.broadcast %27 : f32 to vector<8x64xf32>
      %255 = arith.mulf %254, %230 : vector<8x64xf32>
      %256 = arith.mulf %27, %27 : f32
      %257 = vector.broadcast %256 : f32 to vector<8x64xf32>
      %258 = arith.addf %255, %257 : vector<8x64xf32>
      %259 = arith.addf %253, %258 : vector<8x64xf32>
      %260 = arith.cmpf olt, %259, %251 : vector<8x64xf32>
      %261 = arith.select %260, %259, %251 : vector<8x64xi1>, vector<8x64xf32>
      %c1_i32_95 = arith.constant 1 : i32
      %262 = vector.broadcast %c1_i32_95 : i32 to vector<8x64xi32>
      %263 = arith.select %260, %262, %252 : vector<8x64xi1>, vector<8x64xi32>
      %264 = arith.addf %235, %116 : vector<8x64xf32>
      %265 = vector.broadcast %32 : f32 to vector<8x64xf32>
      %266 = arith.mulf %265, %230 : vector<8x64xf32>
      %267 = arith.mulf %32, %32 : f32
      %268 = vector.broadcast %267 : f32 to vector<8x64xf32>
      %269 = arith.addf %266, %268 : vector<8x64xf32>
      %270 = arith.addf %264, %269 : vector<8x64xf32>
      %271 = arith.cmpf olt, %270, %261 : vector<8x64xf32>
      %272 = arith.select %271, %270, %261 : vector<8x64xi1>, vector<8x64xf32>
      %c2_i32 = arith.constant 2 : i32
      %273 = vector.broadcast %c2_i32 : i32 to vector<8x64xi32>
      %274 = arith.select %271, %273, %263 : vector<8x64xi1>, vector<8x64xi32>
      %275 = arith.addf %235, %121 : vector<8x64xf32>
      %276 = vector.broadcast %37 : f32 to vector<8x64xf32>
      %277 = arith.mulf %276, %230 : vector<8x64xf32>
      %278 = arith.mulf %37, %37 : f32
      %279 = vector.broadcast %278 : f32 to vector<8x64xf32>
      %280 = arith.addf %277, %279 : vector<8x64xf32>
      %281 = arith.addf %275, %280 : vector<8x64xf32>
      %282 = arith.cmpf olt, %281, %272 : vector<8x64xf32>
      %283 = arith.select %282, %281, %272 : vector<8x64xi1>, vector<8x64xf32>
      %c3_i32 = arith.constant 3 : i32
      %284 = vector.broadcast %c3_i32 : i32 to vector<8x64xi32>
      %285 = arith.select %282, %284, %274 : vector<8x64xi1>, vector<8x64xi32>
      %286 = arith.addf %235, %126 : vector<8x64xf32>
      %287 = vector.broadcast %42 : f32 to vector<8x64xf32>
      %288 = arith.mulf %287, %230 : vector<8x64xf32>
      %289 = arith.mulf %42, %42 : f32
      %290 = vector.broadcast %289 : f32 to vector<8x64xf32>
      %291 = arith.addf %288, %290 : vector<8x64xf32>
      %292 = arith.addf %286, %291 : vector<8x64xf32>
      %293 = arith.cmpf olt, %292, %283 : vector<8x64xf32>
      %294 = arith.select %293, %292, %283 : vector<8x64xi1>, vector<8x64xf32>
      %c4_i32 = arith.constant 4 : i32
      %295 = vector.broadcast %c4_i32 : i32 to vector<8x64xi32>
      %296 = arith.select %293, %295, %285 : vector<8x64xi1>, vector<8x64xi32>
      %297 = arith.addf %240, %111 : vector<8x64xf32>
      %298 = vector.broadcast %47 : f32 to vector<8x64xf32>
      %299 = arith.mulf %298, %230 : vector<8x64xf32>
      %300 = arith.mulf %47, %47 : f32
      %301 = vector.broadcast %300 : f32 to vector<8x64xf32>
      %302 = arith.addf %299, %301 : vector<8x64xf32>
      %303 = arith.addf %297, %302 : vector<8x64xf32>
      %304 = arith.cmpf olt, %303, %294 : vector<8x64xf32>
      %305 = arith.select %304, %303, %294 : vector<8x64xi1>, vector<8x64xf32>
      %c5_i32 = arith.constant 5 : i32
      %306 = vector.broadcast %c5_i32 : i32 to vector<8x64xi32>
      %307 = arith.select %304, %306, %296 : vector<8x64xi1>, vector<8x64xi32>
      %308 = arith.addf %240, %116 : vector<8x64xf32>
      %309 = vector.broadcast %52 : f32 to vector<8x64xf32>
      %310 = arith.mulf %309, %230 : vector<8x64xf32>
      %311 = arith.mulf %52, %52 : f32
      %312 = vector.broadcast %311 : f32 to vector<8x64xf32>
      %313 = arith.addf %310, %312 : vector<8x64xf32>
      %314 = arith.addf %308, %313 : vector<8x64xf32>
      %315 = arith.cmpf olt, %314, %305 : vector<8x64xf32>
      %316 = arith.select %315, %314, %305 : vector<8x64xi1>, vector<8x64xf32>
      %c6_i32 = arith.constant 6 : i32
      %317 = vector.broadcast %c6_i32 : i32 to vector<8x64xi32>
      %318 = arith.select %315, %317, %307 : vector<8x64xi1>, vector<8x64xi32>
      %319 = arith.addf %240, %121 : vector<8x64xf32>
      %320 = vector.broadcast %57 : f32 to vector<8x64xf32>
      %321 = arith.mulf %320, %230 : vector<8x64xf32>
      %322 = arith.mulf %57, %57 : f32
      %323 = vector.broadcast %322 : f32 to vector<8x64xf32>
      %324 = arith.addf %321, %323 : vector<8x64xf32>
      %325 = arith.addf %319, %324 : vector<8x64xf32>
      %326 = arith.cmpf olt, %325, %316 : vector<8x64xf32>
      %327 = arith.select %326, %325, %316 : vector<8x64xi1>, vector<8x64xf32>
      %c7_i32 = arith.constant 7 : i32
      %328 = vector.broadcast %c7_i32 : i32 to vector<8x64xi32>
      %329 = arith.select %326, %328, %318 : vector<8x64xi1>, vector<8x64xi32>
      %330 = arith.addf %240, %126 : vector<8x64xf32>
      %331 = vector.broadcast %62 : f32 to vector<8x64xf32>
      %332 = arith.mulf %331, %230 : vector<8x64xf32>
      %333 = arith.mulf %62, %62 : f32
      %334 = vector.broadcast %333 : f32 to vector<8x64xf32>
      %335 = arith.addf %332, %334 : vector<8x64xf32>
      %336 = arith.addf %330, %335 : vector<8x64xf32>
      %337 = arith.cmpf olt, %336, %327 : vector<8x64xf32>
      %338 = arith.select %337, %336, %327 : vector<8x64xi1>, vector<8x64xf32>
      %c8_i32_96 = arith.constant 8 : i32
      %339 = vector.broadcast %c8_i32_96 : i32 to vector<8x64xi32>
      %340 = arith.select %337, %339, %329 : vector<8x64xi1>, vector<8x64xi32>
      %341 = arith.addf %245, %111 : vector<8x64xf32>
      %342 = vector.broadcast %67 : f32 to vector<8x64xf32>
      %343 = arith.mulf %342, %230 : vector<8x64xf32>
      %344 = arith.mulf %67, %67 : f32
      %345 = vector.broadcast %344 : f32 to vector<8x64xf32>
      %346 = arith.addf %343, %345 : vector<8x64xf32>
      %347 = arith.addf %341, %346 : vector<8x64xf32>
      %348 = arith.cmpf olt, %347, %338 : vector<8x64xf32>
      %349 = arith.select %348, %347, %338 : vector<8x64xi1>, vector<8x64xf32>
      %c9_i32 = arith.constant 9 : i32
      %350 = vector.broadcast %c9_i32 : i32 to vector<8x64xi32>
      %351 = arith.select %348, %350, %340 : vector<8x64xi1>, vector<8x64xi32>
      %352 = arith.addf %245, %116 : vector<8x64xf32>
      %353 = vector.broadcast %72 : f32 to vector<8x64xf32>
      %354 = arith.mulf %353, %230 : vector<8x64xf32>
      %355 = arith.mulf %72, %72 : f32
      %356 = vector.broadcast %355 : f32 to vector<8x64xf32>
      %357 = arith.addf %354, %356 : vector<8x64xf32>
      %358 = arith.addf %352, %357 : vector<8x64xf32>
      %359 = arith.cmpf olt, %358, %349 : vector<8x64xf32>
      %360 = arith.select %359, %358, %349 : vector<8x64xi1>, vector<8x64xf32>
      %c10_i32 = arith.constant 10 : i32
      %361 = vector.broadcast %c10_i32 : i32 to vector<8x64xi32>
      %362 = arith.select %359, %361, %351 : vector<8x64xi1>, vector<8x64xi32>
      %363 = arith.addf %245, %121 : vector<8x64xf32>
      %364 = vector.broadcast %77 : f32 to vector<8x64xf32>
      %365 = arith.mulf %364, %230 : vector<8x64xf32>
      %366 = arith.mulf %77, %77 : f32
      %367 = vector.broadcast %366 : f32 to vector<8x64xf32>
      %368 = arith.addf %365, %367 : vector<8x64xf32>
      %369 = arith.addf %363, %368 : vector<8x64xf32>
      %370 = arith.cmpf olt, %369, %360 : vector<8x64xf32>
      %371 = arith.select %370, %369, %360 : vector<8x64xi1>, vector<8x64xf32>
      %c11_i32 = arith.constant 11 : i32
      %372 = vector.broadcast %c11_i32 : i32 to vector<8x64xi32>
      %373 = arith.select %370, %372, %362 : vector<8x64xi1>, vector<8x64xi32>
      %374 = arith.addf %245, %126 : vector<8x64xf32>
      %375 = vector.broadcast %82 : f32 to vector<8x64xf32>
      %376 = arith.mulf %375, %230 : vector<8x64xf32>
      %377 = arith.mulf %82, %82 : f32
      %378 = vector.broadcast %377 : f32 to vector<8x64xf32>
      %379 = arith.addf %376, %378 : vector<8x64xf32>
      %380 = arith.addf %374, %379 : vector<8x64xf32>
      %381 = arith.cmpf olt, %380, %371 : vector<8x64xf32>
      %382 = arith.select %381, %380, %371 : vector<8x64xi1>, vector<8x64xf32>
      %c12_i32 = arith.constant 12 : i32
      %383 = vector.broadcast %c12_i32 : i32 to vector<8x64xi32>
      %384 = arith.select %381, %383, %373 : vector<8x64xi1>, vector<8x64xi32>
      %385 = arith.addf %250, %111 : vector<8x64xf32>
      %386 = vector.broadcast %87 : f32 to vector<8x64xf32>
      %387 = arith.mulf %386, %230 : vector<8x64xf32>
      %388 = arith.mulf %87, %87 : f32
      %389 = vector.broadcast %388 : f32 to vector<8x64xf32>
      %390 = arith.addf %387, %389 : vector<8x64xf32>
      %391 = arith.addf %385, %390 : vector<8x64xf32>
      %392 = arith.cmpf olt, %391, %382 : vector<8x64xf32>
      %393 = arith.select %392, %391, %382 : vector<8x64xi1>, vector<8x64xf32>
      %c13_i32 = arith.constant 13 : i32
      %394 = vector.broadcast %c13_i32 : i32 to vector<8x64xi32>
      %395 = arith.select %392, %394, %384 : vector<8x64xi1>, vector<8x64xi32>
      %396 = arith.addf %250, %116 : vector<8x64xf32>
      %397 = vector.broadcast %92 : f32 to vector<8x64xf32>
      %398 = arith.mulf %397, %230 : vector<8x64xf32>
      %399 = arith.mulf %92, %92 : f32
      %400 = vector.broadcast %399 : f32 to vector<8x64xf32>
      %401 = arith.addf %398, %400 : vector<8x64xf32>
      %402 = arith.addf %396, %401 : vector<8x64xf32>
      %403 = arith.cmpf olt, %402, %393 : vector<8x64xf32>
      %404 = arith.select %403, %402, %393 : vector<8x64xi1>, vector<8x64xf32>
      %c14_i32 = arith.constant 14 : i32
      %405 = vector.broadcast %c14_i32 : i32 to vector<8x64xi32>
      %406 = arith.select %403, %405, %395 : vector<8x64xi1>, vector<8x64xi32>
      %407 = arith.addf %250, %121 : vector<8x64xf32>
      %408 = vector.broadcast %97 : f32 to vector<8x64xf32>
      %409 = arith.mulf %408, %230 : vector<8x64xf32>
      %410 = arith.mulf %97, %97 : f32
      %411 = vector.broadcast %410 : f32 to vector<8x64xf32>
      %412 = arith.addf %409, %411 : vector<8x64xf32>
      %413 = arith.addf %407, %412 : vector<8x64xf32>
      %414 = arith.cmpf olt, %413, %404 : vector<8x64xf32>
      %415 = arith.select %414, %413, %404 : vector<8x64xi1>, vector<8x64xf32>
      %c15_i32 = arith.constant 15 : i32
      %416 = vector.broadcast %c15_i32 : i32 to vector<8x64xi32>
      %417 = arith.select %414, %416, %406 : vector<8x64xi1>, vector<8x64xi32>
      %418 = arith.addf %250, %126 : vector<8x64xf32>
      %419 = vector.broadcast %102 : f32 to vector<8x64xf32>
      %420 = arith.mulf %419, %230 : vector<8x64xf32>
      %421 = arith.mulf %102, %102 : f32
      %422 = vector.broadcast %421 : f32 to vector<8x64xf32>
      %423 = arith.addf %420, %422 : vector<8x64xf32>
      %424 = arith.addf %418, %423 : vector<8x64xf32>
      %425 = arith.cmpf olt, %424, %415 : vector<8x64xf32>
      %c16_i32 = arith.constant 16 : i32
      %426 = vector.broadcast %c16_i32 : i32 to vector<8x64xi32>
      %427 = arith.select %425, %426, %417 : vector<8x64xi1>, vector<8x64xi32>
      %cst_97 = arith.constant 0.000000e+00 : f32
      %428 = vector.broadcast %cst_97 : f32 to vector<8x64xf32>
      %429 = arith.cmpf one, %216, %428 : vector<8x64xf32>
      %c0_i32_98 = arith.constant 0 : i32
      %430 = vector.broadcast %c0_i32_98 : i32 to vector<8x64xi32>
      %431 = arith.select %429, %427, %430 : vector<8x64xi1>, vector<8x64xi32>
      %c1_i32_99 = arith.constant 1 : i32
      %432 = vector.broadcast %c1_i32_99 : i32 to vector<8x64xi32>
      %433 = arith.cmpi eq, %431, %432 : vector<8x64xi32>
      %434 = arith.extui %433 : vector<8x64xi1> to vector<8x64xi32>
      %435 = arith.sitofp %434 : vector<8x64xi32> to vector<8x64xf32>
      %c2_i32_100 = arith.constant 2 : i32
      %436 = vector.broadcast %c2_i32_100 : i32 to vector<8x64xi32>
      %437 = arith.cmpi eq, %431, %436 : vector<8x64xi32>
      %438 = arith.extui %437 : vector<8x64xi1> to vector<8x64xi32>
      %439 = arith.sitofp %438 : vector<8x64xi32> to vector<8x64xf32>
      %c3_i32_101 = arith.constant 3 : i32
      %440 = vector.broadcast %c3_i32_101 : i32 to vector<8x64xi32>
      %441 = arith.cmpi eq, %431, %440 : vector<8x64xi32>
      %442 = arith.extui %441 : vector<8x64xi1> to vector<8x64xi32>
      %443 = arith.sitofp %442 : vector<8x64xi32> to vector<8x64xf32>
      %c4_i32_102 = arith.constant 4 : i32
      %444 = vector.broadcast %c4_i32_102 : i32 to vector<8x64xi32>
      %445 = arith.cmpi eq, %431, %444 : vector<8x64xi32>
      %446 = arith.extui %445 : vector<8x64xi1> to vector<8x64xi32>
      %447 = arith.sitofp %446 : vector<8x64xi32> to vector<8x64xf32>
      %c5_i32_103 = arith.constant 5 : i32
      %448 = vector.broadcast %c5_i32_103 : i32 to vector<8x64xi32>
      %449 = arith.cmpi eq, %431, %448 : vector<8x64xi32>
      %450 = arith.extui %449 : vector<8x64xi1> to vector<8x64xi32>
      %451 = arith.sitofp %450 : vector<8x64xi32> to vector<8x64xf32>
      %c6_i32_104 = arith.constant 6 : i32
      %452 = vector.broadcast %c6_i32_104 : i32 to vector<8x64xi32>
      %453 = arith.cmpi eq, %431, %452 : vector<8x64xi32>
      %454 = arith.extui %453 : vector<8x64xi1> to vector<8x64xi32>
      %455 = arith.sitofp %454 : vector<8x64xi32> to vector<8x64xf32>
      %c7_i32_105 = arith.constant 7 : i32
      %456 = vector.broadcast %c7_i32_105 : i32 to vector<8x64xi32>
      %457 = arith.cmpi eq, %431, %456 : vector<8x64xi32>
      %458 = arith.extui %457 : vector<8x64xi1> to vector<8x64xi32>
      %459 = arith.sitofp %458 : vector<8x64xi32> to vector<8x64xf32>
      %c8_i32_106 = arith.constant 8 : i32
      %460 = vector.broadcast %c8_i32_106 : i32 to vector<8x64xi32>
      %461 = arith.cmpi eq, %431, %460 : vector<8x64xi32>
      %462 = arith.extui %461 : vector<8x64xi1> to vector<8x64xi32>
      %463 = arith.sitofp %462 : vector<8x64xi32> to vector<8x64xf32>
      %c9_i32_107 = arith.constant 9 : i32
      %464 = vector.broadcast %c9_i32_107 : i32 to vector<8x64xi32>
      %465 = arith.cmpi eq, %431, %464 : vector<8x64xi32>
      %466 = arith.extui %465 : vector<8x64xi1> to vector<8x64xi32>
      %467 = arith.sitofp %466 : vector<8x64xi32> to vector<8x64xf32>
      %c10_i32_108 = arith.constant 10 : i32
      %468 = vector.broadcast %c10_i32_108 : i32 to vector<8x64xi32>
      %469 = arith.cmpi eq, %431, %468 : vector<8x64xi32>
      %470 = arith.extui %469 : vector<8x64xi1> to vector<8x64xi32>
      %471 = arith.sitofp %470 : vector<8x64xi32> to vector<8x64xf32>
      %c11_i32_109 = arith.constant 11 : i32
      %472 = vector.broadcast %c11_i32_109 : i32 to vector<8x64xi32>
      %473 = arith.cmpi eq, %431, %472 : vector<8x64xi32>
      %474 = arith.extui %473 : vector<8x64xi1> to vector<8x64xi32>
      %475 = arith.sitofp %474 : vector<8x64xi32> to vector<8x64xf32>
      %c12_i32_110 = arith.constant 12 : i32
      %476 = vector.broadcast %c12_i32_110 : i32 to vector<8x64xi32>
      %477 = arith.cmpi eq, %431, %476 : vector<8x64xi32>
      %478 = arith.extui %477 : vector<8x64xi1> to vector<8x64xi32>
      %479 = arith.sitofp %478 : vector<8x64xi32> to vector<8x64xf32>
      %c13_i32_111 = arith.constant 13 : i32
      %480 = vector.broadcast %c13_i32_111 : i32 to vector<8x64xi32>
      %481 = arith.cmpi eq, %431, %480 : vector<8x64xi32>
      %482 = arith.extui %481 : vector<8x64xi1> to vector<8x64xi32>
      %483 = arith.sitofp %482 : vector<8x64xi32> to vector<8x64xf32>
      %c14_i32_112 = arith.constant 14 : i32
      %484 = vector.broadcast %c14_i32_112 : i32 to vector<8x64xi32>
      %485 = arith.cmpi eq, %431, %484 : vector<8x64xi32>
      %486 = arith.extui %485 : vector<8x64xi1> to vector<8x64xi32>
      %487 = arith.sitofp %486 : vector<8x64xi32> to vector<8x64xf32>
      %c15_i32_113 = arith.constant 15 : i32
      %488 = vector.broadcast %c15_i32_113 : i32 to vector<8x64xi32>
      %489 = arith.cmpi eq, %431, %488 : vector<8x64xi32>
      %490 = arith.extui %489 : vector<8x64xi1> to vector<8x64xi32>
      %491 = arith.sitofp %490 : vector<8x64xi32> to vector<8x64xf32>
      %c16_i32_114 = arith.constant 16 : i32
      %492 = vector.broadcast %c16_i32_114 : i32 to vector<8x64xi32>
      %493 = arith.cmpi eq, %431, %492 : vector<8x64xi32>
      %494 = arith.extui %493 : vector<8x64xi1> to vector<8x64xi32>
      %495 = arith.sitofp %494 : vector<8x64xi32> to vector<8x64xf32>
      %496 = tpu.concatenate %435, %439, %443, %447, %451, %455, %459, %463, %467, %471, %475, %479, %483, %487, %491, %495 in 0 : vector<8x64xf32>, vector<8x64xf32>, vector<8x64xf32>, vector<8x64xf32>, vector<8x64xf32>, vector<8x64xf32>, vector<8x64xf32>, vector<8x64xf32>, vector<8x64xf32>, vector<8x64xf32>, vector<8x64xf32>, vector<8x64xf32>, vector<8x64xf32>, vector<8x64xf32>, vector<8x64xf32>, vector<8x64xf32> -> vector<128x64xf32>
      %cst_115 = arith.constant dense<0.000000e+00> : vector<128x2xf32>
      %497 = tpu.matmul %496, %133, %cst_115 {dimension_numbers = #tpu.dot_dimension_numbers<[1], [0], [0], [1], [0, 0, 1, 1], [], []>} : vector<128x64xf32>, vector<64x2xf32>, vector<128x2xf32> -> vector<128x2xf32>
      %cst_116 = arith.constant dense<0.000000e+00> : vector<16x2xf32>
      %498 = tpu.matmul %146, %497, %cst_116 {dimension_numbers = #tpu.dot_dimension_numbers<[1], [0], [0], [1], [0, 0, 1, 1], [], []>} : vector<16x128xf32>, vector<128x2xf32>, vector<16x2xf32> -> vector<16x2xf32>
      %cst_117 = arith.constant dense<0.000000e+00> : vector<16x2xf32>
      %499 = tpu.matmul %152, %497, %cst_117 {dimension_numbers = #tpu.dot_dimension_numbers<[1], [0], [0], [1], [0, 0, 1, 1], [], []>} : vector<16x128xf32>, vector<128x2xf32>, vector<16x2xf32> -> vector<16x2xf32>
      %500 = vector.extract_strided_slice %498 {offsets = [0, 0], sizes = [16, 1], strides = [1, 1]} : vector<16x2xf32> to vector<16x1xf32>
      %501 = arith.addf %arg8, %500 : vector<16x1xf32>
      %502 = vector.extract_strided_slice %498 {offsets = [0, 1], sizes = [16, 1], strides = [1, 1]} : vector<16x2xf32> to vector<16x1xf32>
      %503 = arith.addf %arg10, %502 : vector<16x1xf32>
      %504 = vector.extract_strided_slice %499 {offsets = [0, 0], sizes = [16, 1], strides = [1, 1]} : vector<16x2xf32> to vector<16x1xf32>
      %505 = arith.addf %arg9, %504 : vector<16x1xf32>
      %506 = vector.broadcast %218 : f32 to vector<16x1xf32>
      %507 = arith.mulf %506, %500 : vector<16x1xf32>
      %508 = arith.addf %505, %507 : vector<16x1xf32>
      scf.yield %501, %508, %503 : vector<16x1xf32>, vector<16x1xf32>, vector<16x1xf32>
    }
    %c8_i32_57 = arith.constant 8 : i32
    %cst_58 = arith.constant 1.000000e+00 : f32
    %156 = vector.broadcast %cst_58 : f32 to vector<16x1xf32>
    %157 = arith.maximumf %155#0, %156 : vector<16x1xf32>
    %158 = arith.divf %155#1, %157 : vector<16x1xf32>
    %159 = math.floor %158 : vector<16x1xf32>
    %160 = arith.divf %155#2, %157 : vector<16x1xf32>
    %161 = math.floor %160 : vector<16x1xf32>
    %162 = tpu.iota {dimensions = array<i32: 1>} : vector<16x64xi32>
    %163 = arith.sitofp %162 : vector<16x64xi32> to vector<16x64xf32>
    %164 = tpu.iota {dimensions = array<i32: 1>} : vector<16x64xi32>
    %165 = arith.sitofp %164 : vector<16x64xi32> to vector<16x64xf32>
    %cst_59 = arith.constant 5.000000e+00 : f32
    %166 = vector.broadcast %cst_59 : f32 to vector<16x1xf32>
    %167 = arith.subf %159, %166 : vector<16x1xf32>
    %168 = vector.broadcast %167 : vector<16x1xf32> to vector<16x64xf32>
    %169 = arith.cmpf oge, %163, %168 : vector<16x64xf32>
    %cst_60 = arith.constant 5.000000e+00 : f32
    %170 = vector.broadcast %cst_60 : f32 to vector<16x1xf32>
    %171 = arith.addf %159, %170 : vector<16x1xf32>
    %172 = vector.broadcast %171 : vector<16x1xf32> to vector<16x64xf32>
    %173 = arith.cmpf olt, %163, %172 : vector<16x64xf32>
    %174 = arith.andi %169, %173 : vector<16x64xi1>
    %175 = arith.extui %174 : vector<16x64xi1> to vector<16x64xi32>
    %176 = arith.sitofp %175 : vector<16x64xi32> to vector<16x64xf32>
    %cst_61 = arith.constant 5.000000e+00 : f32
    %177 = vector.broadcast %cst_61 : f32 to vector<16x1xf32>
    %178 = arith.subf %161, %177 : vector<16x1xf32>
    %179 = vector.broadcast %178 : vector<16x1xf32> to vector<16x64xf32>
    %180 = arith.cmpf oge, %165, %179 : vector<16x64xf32>
    %cst_62 = arith.constant 5.000000e+00 : f32
    %181 = vector.broadcast %cst_62 : f32 to vector<16x1xf32>
    %182 = arith.addf %161, %181 : vector<16x1xf32>
    %183 = vector.broadcast %182 : vector<16x1xf32> to vector<16x64xf32>
    %184 = arith.cmpf olt, %165, %183 : vector<16x64xf32>
    %185 = arith.andi %180, %184 : vector<16x64xi1>
    %186 = arith.extui %185 : vector<16x64xi1> to vector<16x64xi32>
    %187 = arith.sitofp %186 : vector<16x64xi32> to vector<16x64xf32>
    %cst_63 = arith.constant dense<0.000000e+00> : vector<16x64xf32>
    %188 = tpu.matmul %176, %0, %cst_63 {dimension_numbers = #tpu.dot_dimension_numbers<[1], [0], [0], [1], [0, 0, 1, 1], [], []>} : vector<16x64xf32>, vector<64x64xf32>, vector<16x64xf32> -> vector<16x64xf32>
    %cst_64 = arith.constant dense<0.000000e+00> : vector<16x64xf32>
    %189 = tpu.matmul %176, %15, %cst_64 {dimension_numbers = #tpu.dot_dimension_numbers<[1], [0], [0], [1], [0, 0, 1, 1], [], []>} : vector<16x64xf32>, vector<64x64xf32>, vector<16x64xf32> -> vector<16x64xf32>
    %190 = arith.mulf %188, %187 : vector<16x64xf32>
    %cst_65 = arith.constant dense<0.000000e+00> : vector<16xf32>
    %191 = vector.multi_reduction <add>, %190, %cst_65 [1] : vector<16x64xf32> to vector<16xf32>
    %192 = vector.shape_cast %191 : vector<16xf32> to vector<16x1xf32>
    %193 = arith.mulf %189, %187 : vector<16x64xf32>
    %cst_66 = arith.constant dense<0.000000e+00> : vector<16xf32>
    %194 = vector.multi_reduction <add>, %193, %cst_66 [1] : vector<16x64xf32> to vector<16xf32>
    %195 = vector.shape_cast %194 : vector<16xf32> to vector<16x1xf32>
    %cst_67 = arith.constant 0.000000e+00 : f32
    %196 = vector.broadcast %cst_67 : f32 to vector<16x1xf32>
    %197 = arith.cmpf ogt, %192, %196 : vector<16x1xf32>
    %cst_68 = arith.constant 1.000000e+00 : f32
    %198 = vector.broadcast %cst_68 : f32 to vector<16x1xf32>
    %199 = arith.maximumf %195, %198 : vector<16x1xf32>
    %200 = arith.divf %192, %199 : vector<16x1xf32>
    %cst_69 = arith.constant 0.000000e+00 : f32
    %201 = vector.broadcast %cst_69 : f32 to vector<16x1xf32>
    %202 = arith.select %197, %200, %201 : vector<16x1xi1>, vector<16x1xf32>
    %cst_70 = arith.constant 5.000000e-01 : f32
    %203 = vector.broadcast %cst_70 : f32 to vector<16x1xf32>
    %204 = arith.addf %155#0, %203 : vector<16x1xf32>
    %205 = math.floor %204 : vector<16x1xf32>
    %206 = arith.fptosi %205 : vector<16x1xf32> to vector<16x1xi32>
    %c0_71 = arith.constant 0 : index
    %c0_72 = arith.constant 0 : index
    %207 = vector.load %arg3[%c0_71, %c0_72] : memref<16x1xi32, #tpu.memory_space<vmem>>, vector<16x1xi32>
    tpu.vector_store %arg3[%c0_71, %c0_72], %206 {strides = array<i32>} : memref<16x1xi32, #tpu.memory_space<vmem>>, vector<16x1xi32>,
    %208 = arith.fptosi %159 : vector<16x1xf32> to vector<16x1xi32>
    %c0_73 = arith.constant 0 : index
    %c0_74 = arith.constant 0 : index
    %209 = vector.load %arg4[%c0_73, %c0_74] : memref<16x1xi32, #tpu.memory_space<vmem>>, vector<16x1xi32>
    tpu.vector_store %arg4[%c0_73, %c0_74], %208 {strides = array<i32>} : memref<16x1xi32, #tpu.memory_space<vmem>>, vector<16x1xi32>,
    %210 = arith.fptosi %161 : vector<16x1xf32> to vector<16x1xi32>
    %c0_75 = arith.constant 0 : index
    %c0_76 = arith.constant 0 : index
    %211 = vector.load %arg5[%c0_75, %c0_76] : memref<16x1xi32, #tpu.memory_space<vmem>>, vector<16x1xi32>
    tpu.vector_store %arg5[%c0_75, %c0_76], %210 {strides = array<i32>} : memref<16x1xi32, #tpu.memory_space<vmem>>, vector<16x1xi32>,
    %c0_77 = arith.constant 0 : index
    %c0_78 = arith.constant 0 : index
    %212 = vector.load %arg6[%c0_77, %c0_78] : memref<16x1xf32, #tpu.memory_space<vmem>>, vector<16x1xf32>
    tpu.vector_store %arg6[%c0_77, %c0_78], %202 {strides = array<i32>} : memref<16x1xf32, #tpu.memory_space<vmem>>, vector<16x1xf32>,
    return
  }
}

</mosaic_0001>

<llo_original>
// kernel: run.1
$region0: #{run.1}
  #allocation0 [shape = 'u32[]', space=smem, size = 0x4, offset = 0x4, fixed_abs, tag = 'smem constant byte address 0x4 - core index']
  #allocation1 [shape = 'u32[72,128]{1,0:T(1,128)}', space=vmem, size = 0x9000, scoped, tag = 'internal scratch']
  %s0 = inlined_call_operand.vmem [shape: f32[64,64], index: 0, kind: input, shape index: {}]
  %s1 = inlined_call_operand.vmem [shape: f32[16], index: 1, kind: input, shape index: {}]
  %s2 = inlined_call_operand.hbm [shape: s32[1,1], index: 2, kind: output, shape index: {0}]
  %s3 = inlined_call_operand.vmem [shape: s32[16,1], index: 3, kind: output, shape index: {1}]
  %s4 = inlined_call_operand.vmem [shape: s32[16,1], index: 4, kind: output, shape index: {2}]
  %s5 = inlined_call_operand.vmem [shape: s32[16,1], index: 5, kind: output, shape index: {3}]
  %s6 = inlined_call_operand.vmem [shape: f32[16,1], index: 6, kind: output, shape index: {4}]
  %7 = xla_tuple %s2, %s3, %s4, %s5, %s6
  %s8 = sld [smem:[#allocation0]]
  $region61: #{run.1} parent=0
    _
  %s10 = ssub.s32 1, %s8
  %s11 = scalar_select 0, %s10, %s8
  $region1: #{run.1} parent=0
    #allocation2 [shape = 'u8[512]{0}', space=smem, size = 0x200, scoped, tag = 'input window, operand 1, single buffered']
    #allocation3 [shape = 's32[1]{0}', space=sflag, size = 0x4, scoped, tag = 'scoped memory for run.1']
    #allocation4 [shape = 's32[1]{0}', space=sflag, size = 0x4, scoped, tag = 'scoped memory for run.1']
    #allocation5 [shape = 'u8[512]{0}', space=vmem, size = 0x400, scoped, tag = 'output window, operand 0, single buffered']
    %12 = vsyncpa [#allocation4], 0
    %13 = vsyncpa [#allocation3], 0
    // Predicated region
    $region2: #{run.1} parent=1 // pred_check
      _
    $region3: #{run.1} parent=1 // pred_check_branch
      %15 = sbr.rel (0) target = $region5
    $region4: #{run.1} parent=1 // pred_region
      _
    $region5: #{run.1} parent=1 // pred_fallthru
      _
    // Predicated region
    $region6: #{run.1} parent=1 // pred_check
      _
    $region7: #{run.1} parent=1 // pred_check_branch
      %17 = sbr.rel (0) target = $region9
    $region8: #{run.1} parent=1 // pred_region
      %19 = vsyncadd [#allocation4], 0
      %s21 = sshll.u32 %s1, 4
      %s22 = int_to_ptr.vmem [resolvable:$true] %s21
      %24 = dma.vmem_to_smem %s22, 16, [#allocation2], [#allocation4]
    $region9: #{run.1} parent=1 // pred_fallthru
      _
    // Predicated region
    $region10: #{run.1} parent=1 // pred_check
      _
    $region11: #{run.1} parent=1 // pred_check_branch
      %26 = sbr.rel (0) target = $region13
    $region12: #{run.1} parent=1 // pred_region
      %28 = dma.done [#allocation4], 16
    $region13: #{run.1} parent=1 // pred_fallthru
      _
    %29 = sfence
    %v30 = vld [vmem:[%s0] sm:$0xff]
    %v31 = vld [vmem:[%s0 + $0x8] sm:$0xff]
    %v32 = vld [vmem:[%s0 + $0x10] sm:$0xff]
    %v33 = vld [vmem:[%s0 + $0x18] sm:$0xff]
    %v34 = vld [vmem:[%s0 + $0x20] sm:$0xff]
    %v35 = vld [vmem:[%s0 + $0x28] sm:$0xff]
    %v36 = vld [vmem:[%s0 + $0x30] sm:$0xff]
    %v37 = vld [vmem:[%s0 + $0x38] sm:$0xff]
    %vm38 = vcmask 523264
    %v39 = vsel %vm38, %v30, inf
    %v40 = vsel %vm38, %v31, inf
    %v41 = vsel %vm38, %v32, inf
    %v42 = vsel %vm38, %v33, inf
    %v43 = vsel %vm38, %v34, inf
    %v44 = vmin.f32 %v39, %v43
    %v45 = vsel %vm38, %v35, inf
    %v46 = vmin.f32 %v40, %v45
    %v47 = vsel %vm38, %v36, inf
    %v48 = vmin.f32 %v41, %v47
    %v49 = vsel %vm38, %v37, inf
    %v50 = vmin.f32 %v42, %v49
    %v51 = vmin.f32 %v44, %v46
    %v52 = vmin.f32 %v48, %v50
    %v53 = vmin.f32 %v51, %v52
    %54 = vmin.xlane.f32.xlu0 %v53
    %v55 = vpop.xlane.xlu0 %54
    %v56 = vrot.slane %v55, 4
    %v57 = vmin.f32 %v55, %v56
    %v58 = vrot.slane %v57, 2
    %v59 = vmin.f32 %v57, %v58
    %v60 = vrot.slane %v59, 1
    %v61 = vmin.f32 %v59, %v60
    %s62 = vtos %v61
    %v63 = vsel %vm38, %v30, -inf
    %v64 = vsel %vm38, %v31, -inf
    %v65 = vsel %vm38, %v32, -inf
    %v66 = vsel %vm38, %v33, -inf
    %v67 = vsel %vm38, %v34, -inf
    %v68 = vmax.f32 %v63, %v67
    %v69 = vsel %vm38, %v35, -inf
    %v70 = vmax.f32 %v64, %v69
    %v71 = vsel %vm38, %v36, -inf
    %v72 = vmax.f32 %v65, %v71
    %v73 = vsel %vm38, %v37, -inf
    %v74 = vmax.f32 %v66, %v73
    %v75 = vmax.f32 %v68, %v70
    %v76 = vmax.f32 %v72, %v74
    %v77 = vmax.f32 %v75, %v76
    %78 = vmax.xlane.f32.xlu0 %v77
    %v79 = vpop.xlane.xlu0 %78
    %v80 = vrot.slane %v79, 4
    %v81 = vmax.f32 %v79, %v80
    %v82 = vrot.slane %v81, 2
    %v83 = vmax.f32 %v81, %v82
    %v84 = vrot.slane %v83, 1
    %v85 = vmax.f32 %v83, %v84
    %s86 = vtos %v85
    %s87 = ssub.f32 %s86, %s62
    %s88 = sadd.f32 %s87, 1e-05
    %v89 = vstv %s88
    %v90 = vrcp.pop %v89
    %v91 = vmul.f32 %v89, %v90
    %v92 = vsub.f32 1.0, %v91
    %v93 = vmul.f32 %v90, %v92
    %v94 = vadd.f32 %v90, %v93
    %vm95 = vweird.f32 %v89
    %vm96 = vweird.f32 %v90
    %vm97 = vmor %vm95, %vm96
    %v98 = vsel %vm97, %v90, %v94
    %v99 = vand.u32 2147483647, %v89
    %vm100 = vcmp.eq.f32.partialorder %v99, 8.507059e+37
    %v101 = vand.u32 %v89, 2147483648
    %v102 = vor.u32 1.1754944e-38, %v101
    %v103 = vsel %vm100, %v102, %v98
    %s104 = vtos %v103
    %vm105 = vcmp.ne.f32.partialorder %v30, 0.0
    %vm106 = vcmp.ne.f32.partialorder %v31, 0.0
    %vm107 = vcmp.ne.f32.partialorder %v32, 0.0
    %vm108 = vcmp.ne.f32.partialorder %v33, 0.0
    %vm109 = vcmp.ne.f32.partialorder %v34, 0.0
    %vm110 = vcmp.ne.f32.partialorder %v35, 0.0
    %vm111 = vcmp.ne.f32.partialorder %v36, 0.0
    %vm112 = vcmp.ne.f32.partialorder %v37, 0.0
    %v113 = vsel %vm105, 1, 0
    %v114 = vsel %vm106, 1, 0
    %v115 = vsel %vm107, 1, 0
    %v116 = vsel %vm108, 1, 0
    %v117 = vsel %vm109, 1, 0
    %v118 = vsel %vm110, 1, 0
    %v119 = vsel %vm111, 1, 0
    %v120 = vsel %vm112, 1, 0
    %v121 = vcvt.s32.f32 %v113
    %v122 = vcvt.s32.f32 %v114
    %v123 = vcvt.s32.f32 %v115
    %v124 = vcvt.s32.f32 %v116
    %v125 = vcvt.s32.f32 %v117
    %v126 = vcvt.s32.f32 %v118
    %v127 = vcvt.s32.f32 %v119
    %v128 = vcvt.s32.f32 %v120
    %v129 = vsel %vm38, %v121, 0.0
    %v130 = vsel %vm38, %v122, 0.0
    %v131 = vadd.f32 %v129, %v130
    %v132 = vsel %vm38, %v123, 0.0
    %v133 = vadd.f32 %v131, %v132
    %v134 = vsel %vm38, %v124, 0.0
    %v135 = vadd.f32 %v133, %v134
    %v136 = vsel %vm38, %v125, 0.0
    %v137 = vadd.f32 %v135, %v136
    %v138 = vsel %vm38, %v126, 0.0
    %v139 = vadd.f32 %v137, %v138
    %v140 = vsel %vm38, %v127, 0.0
    %v141 = vadd.f32 %v139, %v140
    %v142 = vsel %vm38, %v128, 0.0
    %v143 = vadd.f32 %v141, %v142
    %144 = vadd.xlane.f32.xlu0 %v143
    %v145 = vpop.xlane.xlu0 %144
    %v146 = vrot.slane %v145, 4
    %v147 = vadd.f32 %v145, %v146
    %v148 = vrot.slane %v147, 2
    %v149 = vadd.f32 %v147, %v148
    %v150 = vrot.slane %v149, 1
    %v151 = vadd.f32 %v149, %v150
    %s152 = vtos %v151
    %v153 = vstv %s152
    %v154 = vcvt.f32.s32.to.zero.pseudo %v153
    %vm155 = vcmask 0
    %156 = vst.msk [vmem:[#allocation5] sm:$0x1] %vm155, %v154
    %s157 = sld [smem:[#allocation2]]
    %p158 = scmp.eq.f32.partialorder %s157, 0.0
    %s159 = ssub.f32 %s157, %s62
    %s160 = smul.f32 %s159, %s104
    %s161 = scalar_select %p158, 1.0, %s160
    %s162 = sld [smem:[#allocation2 + $0x1]]
    %p163 = scmp.eq.f32.partialorder %s162, 0.0
    %s164 = ssub.f32 %s162, %s62
    %s165 = smul.f32 %s164, %s104
    %s166 = scalar_select %p163, 1.0, %s165
    %s167 = sld [smem:[#allocation2 + $0x2]]
    %p168 = scmp.eq.f32.partialorder %s167, 0.0
    %s169 = ssub.f32 %s167, %s62
    %s170 = smul.f32 %s169, %s104
    %s171 = scalar_select %p168, 1.0, %s170
    %s172 = sld [smem:[#allocation2 + $0x3]]
    %p173 = scmp.eq.f32.partialorder %s172, 0.0
    %s174 = ssub.f32 %s172, %s62
    %s175 = smul.f32 %s174, %s104
    %s176 = scalar_select %p173, 1.0, %s175
    %s177 = sld [smem:[#allocation2 + $0x4]]
    %p178 = scmp.eq.f32.partialorder %s177, 0.0
    %s179 = ssub.f32 %s177, %s62
    %s180 = smul.f32 %s179, %s104
    %s181 = scalar_select %p178, 1.0, %s180
    %s182 = sld [smem:[#allocation2 + $0x5]]
    %p183 = scmp.eq.f32.partialorder %s182, 0.0
    %s184 = ssub.f32 %s182, %s62
    %s185 = smul.f32 %s184, %s104
    %s186 = scalar_select %p183, 1.0, %s185
    %s187 = sld [smem:[#allocation2 + $0x6]]
    %p188 = scmp.eq.f32.partialorder %s187, 0.0
    %s189 = ssub.f32 %s187, %s62
    %s190 = smul.f32 %s189, %s104
    %s191 = scalar_select %p188, 1.0, %s190
    %s192 = sld [smem:[#allocation2 + $0x7]]
    %p193 = scmp.eq.f32.partialorder %s192, 0.0
    %s194 = ssub.f32 %s192, %s62
    %s195 = smul.f32 %s194, %s104
    %s196 = scalar_select %p193, 1.0, %s195
    %s197 = sld [smem:[#allocation2 + $0x8]]
    %p198 = scmp.eq.f32.partialorder %s197, 0.0
    %s199 = ssub.f32 %s197, %s62
    %s200 = smul.f32 %s199, %s104
    %s201 = scalar_select %p198, 1.0, %s200
    %s202 = sld [smem:[#allocation2 + $0x9]]
    %p203 = scmp.eq.f32.partialorder %s202, 0.0
    %s204 = ssub.f32 %s202, %s62
    %s205 = smul.f32 %s204, %s104
    %s206 = scalar_select %p203, 1.0, %s205
    %s207 = sld [smem:[#allocation2 + $0xa]]
    %p208 = scmp.eq.f32.partialorder %s207, 0.0
    %s209 = ssub.f32 %s207, %s62
    %s210 = smul.f32 %s209, %s104
    %s211 = scalar_select %p208, 1.0, %s210
    %s212 = sld [smem:[#allocation2 + $0xb]]
    %p213 = scmp.eq.f32.partialorder %s212, 0.0
    %s214 = ssub.f32 %s212, %s62
    %s215 = smul.f32 %s214, %s104
    %s216 = scalar_select %p213, 1.0, %s215
    %s217 = sld [smem:[#allocation2 + $0xc]]
    %p218 = scmp.eq.f32.partialorder %s217, 0.0
    %s219 = ssub.f32 %s217, %s62
    %s220 = smul.f32 %s219, %s104
    %s221 = scalar_select %p218, 1.0, %s220
    %s222 = sld [smem:[#allocation2 + $0xd]]
    %p223 = scmp.eq.f32.partialorder %s222, 0.0
    %s224 = ssub.f32 %s222, %s62
    %s225 = smul.f32 %s224, %s104
    %s226 = scalar_select %p223, 1.0, %s225
    %s227 = sld [smem:[#allocation2 + $0xe]]
    %p228 = scmp.eq.f32.partialorder %s227, 0.0
    %s229 = ssub.f32 %s227, %s62
    %s230 = smul.f32 %s229, %s104
    %s231 = scalar_select %p228, 1.0, %s230
    %s232 = sld [smem:[#allocation2 + $0xf]]
    %p233 = scmp.eq.f32.partialorder %s232, 0.0
    %s234 = ssub.f32 %s232, %s62
    %s235 = smul.f32 %s234, %s104
    %s236 = scalar_select %p233, 1.0, %s235
    %v237 = vlaneseq
    %v238 = vand.u32 %v237, 127
    %v239 = vcvt.s32.f32 %v238
    %v240 = vlaneseq
    %v241 = vshrl.u32 %v240, 7
    %v242 = vcvt.s32.f32 %v241
    %v243 = vsub.f32 %v239, 8.0
    %v244 = vmul.f32 %v243, %v243
    %v245 = vmul.f32 %v244, 0.00390625
    %v246 = vsub.f32 %v239, 24.0
    %v247 = vmul.f32 %v246, %v246
    %v248 = vmul.f32 %v247, 0.00390625
    %v249 = vsub.f32 %v239, 40.0
    %v250 = vmul.f32 %v249, %v249
    %v251 = vmul.f32 %v250, 0.00390625
    %v252 = vsub.f32 %v239, 56.0
    %v253 = vmul.f32 %v252, %v252
    %v254 = vmul.f32 %v253, 0.00390625
    %vm255 = vcmp.eq.s32.totalorder %v238, 0
    %v256 = vadd.s32 %v241, 8
    %v257 = vadd.s32 %v241, 16
    %v258 = vadd.s32 %v241, 24
    %v259 = vadd.s32 %v241, 32
    %v260 = vadd.s32 %v241, 40
    %v261 = vadd.s32 %v241, 48
    %v262 = vadd.s32 %v241, 56
    %v263 = vcvt.s32.f32 %v256
    %v264 = vcvt.s32.f32 %v257
    %v265 = vcvt.s32.f32 %v258
    %v266 = vcvt.s32.f32 %v259
    %v267 = vcvt.s32.f32 %v260
    %v268 = vcvt.s32.f32 %v261
    %v269 = vcvt.s32.f32 %v262
    %v270 = vsel %vm255, 1.0, %v242
    %v271 = vsel %vm255, 1.0, %v263
    %v272 = vsel %vm255, 1.0, %v264
    %v273 = vsel %vm255, 1.0, %v265
    %v274 = vsel %vm255, 1.0, %v266
    %v275 = vsel %vm255, 1.0, %v267
    %v276 = vsel %vm255, 1.0, %v268
    %v277 = vsel %vm255, 1.0, %v269
    %v278 = vmul.u32 %v241, 8
    %v279 = vmul.u32 %v256, 8
    %vm280 = vcmp.ge.s32.totalorder %v238, %v278
    %vm281 = vcmp.ge.s32.totalorder %v238, %v279
    %v282 = vadd.s32 %v241, 1
    %v283 = vadd.s32 %v256, 1
    %v284 = vmul.u32 %v282, 8
    %v285 = vmul.u32 %v283, 8
    %vm286 = vcmp.lt.s32.totalorder %v238, %v284
    %vm287 = vcmp.lt.s32.totalorder %v238, %v285
    %vm288 = vmand %vm280, %vm286
    %vm289 = vmand %vm281, %vm287
    %v290 = vsel %vm288, 1, 0
    %v291 = vsel %vm289, 1, 0
    %v292 = vcvt.s32.f32 %v290
    %v293 = vcvt.s32.f32 %v291
    %v294 = vsub.s32 %v238, %v278
    %v295 = vsub.s32 %v238, %v279
    %v296 = vcvt.s32.f32 %v294
    %v297 = vcvt.s32.f32 %v295
    %v298 = vsel %vm288, %v296, 0.0
    %v299 = vsel %vm289, %v297, 0.0
    loop: start=0, step=1, limit=8
    $region14: #{run.1} parent=1 // loop_pre_header
      _
    $region15: #{run.1} parent=1 // loop_header
      %s301 = sphi 0, %s305
      %p302 = scmp.ge.s32.totalorder %s301, 8
      %v306 = vphi 0.0, %v705
      %v307 = vphi 0.0, %v706
      %v308 = vphi 0.0, %v713
      %v309 = vphi 0.0, %v714
      %v310 = vphi 0.0, %v707
      %v311 = vphi 0.0, %v708
    $region16: #{run.1} parent=1 // loop_header_branch
      %304 = sbr.rel (%p302) target = $region20
    $region17: #{run.1} parent=1 // loop_body
      %s312 = smul.u32 %s301, 8
      %s313 = scalar_lea.vmem %s0, %s312
      %v314 = vld [vmem:[%s313] sm:$0xff]
      %s315 = scvt.s32.f32 %s312
      %v316 = vstv %s315
      %v317 = vadd.f32 %v242, %v316
      %v318 = vstv %s62
      %v319 = vsub.f32 %v314, %v318
      %v320 = vstv %s104
      %v321 = vmul.f32 %v319, %v320
      %vm322 = vcmp.eq.f32.partialorder %v314, 0.0
      %v323 = vsel %vm322, 1.0, %v321
      %v324 = vmul.f32 %v323, -2.0
      %v325 = vsub.f32 %v317, 8.0
      %v326 = vmul.f32 %v325, %v325
      %v327 = vmul.f32 %v326, 0.00390625
      %v328 = vsub.f32 %v317, 24.0
      %v329 = vmul.f32 %v328, %v328
      %v330 = vmul.f32 %v329, 0.00390625
      %v331 = vsub.f32 %v317, 40.0
      %v332 = vmul.f32 %v331, %v331
      %v333 = vmul.f32 %v332, 0.00390625
      %v334 = vsub.f32 %v317, 56.0
      %v335 = vmul.f32 %v334, %v334
      %v336 = vmul.f32 %v335, 0.00390625
      %v337 = vadd.f32 %v327, %v245
      %v338 = vstv %s161
      %v339 = vmul.f32 %v338, %v324
      %s340 = smul.f32 %s161, %s161
      %v341 = vstv %s340
      %v342 = vadd.f32 %v339, %v341
      %v343 = vadd.f32 %v337, %v342
      %vm344 = vcmp.lt.f32.partialorder %v343, inf
      %v345 = vsel %vm344, %v343, inf
      %v346 = vsel %vm344, 1, 0
      %v347 = vadd.f32 %v327, %v248
      %v348 = vstv %s166
      %v349 = vmul.f32 %v348, %v324
      %s350 = smul.f32 %s166, %s166
      %v351 = vstv %s350
      %v352 = vadd.f32 %v349, %v351
      %v353 = vadd.f32 %v347, %v352
      %vm354 = vcmp.lt.f32.partialorder %v353, %v345
      %v355 = vsel %vm354, %v353, %v345
      %v356 = vsel %vm354, 2, %v346
      %v357 = vadd.f32 %v327, %v251
      %v358 = vstv %s171
      %v359 = vmul.f32 %v358, %v324
      %s360 = smul.f32 %s171, %s171
      %v361 = vstv %s360
      %v362 = vadd.f32 %v359, %v361
      %v363 = vadd.f32 %v357, %v362
      %vm364 = vcmp.lt.f32.partialorder %v363, %v355
      %v365 = vsel %vm364, %v363, %v355
      %v366 = vsel %vm364, 3, %v356
      %v367 = vadd.f32 %v327, %v254
      %v368 = vstv %s176
      %v369 = vmul.f32 %v368, %v324
      %s370 = smul.f32 %s176, %s176
      %v371 = vstv %s370
      %v372 = vadd.f32 %v369, %v371
      %v373 = vadd.f32 %v367, %v372
      %vm374 = vcmp.lt.f32.partialorder %v373, %v365
      %v375 = vsel %vm374, %v373, %v365
      %v376 = vsel %vm374, 4, %v366
      %v377 = vadd.f32 %v330, %v245
      %v378 = vstv %s181
      %v379 = vmul.f32 %v378, %v324
      %s380 = smul.f32 %s181, %s181
      %v381 = vstv %s380
      %v382 = vadd.f32 %v379, %v381
      %v383 = vadd.f32 %v377, %v382
      %vm384 = vcmp.lt.f32.partialorder %v383, %v375
      %v385 = vsel %vm384, %v383, %v375
      %v386 = vsel %vm384, 5, %v376
      %v387 = vadd.f32 %v330, %v248
      %v388 = vstv %s186
      %v389 = vmul.f32 %v388, %v324
      %s390 = smul.f32 %s186, %s186
      %v391 = vstv %s390
      %v392 = vadd.f32 %v389, %v391
      %v393 = vadd.f32 %v387, %v392
      %vm394 = vcmp.lt.f32.partialorder %v393, %v385
      %v395 = vsel %vm394, %v393, %v385
      %v396 = vsel %vm394, 6, %v386
      %v397 = vadd.f32 %v330, %v251
      %v398 = vstv %s191
      %v399 = vmul.f32 %v398, %v324
      %s400 = smul.f32 %s191, %s191
      %v401 = vstv %s400
      %v402 = vadd.f32 %v399, %v401
      %v403 = vadd.f32 %v397, %v402
      %vm404 = vcmp.lt.f32.partialorder %v403, %v395
      %v405 = vsel %vm404, %v403, %v395
      %v406 = vsel %vm404, 7, %v396
      %v407 = vadd.f32 %v330, %v254
      %v408 = vstv %s196
      %v409 = vmul.f32 %v408, %v324
      %s410 = smul.f32 %s196, %s196
      %v411 = vstv %s410
      %v412 = vadd.f32 %v409, %v411
      %v413 = vadd.f32 %v407, %v412
      %vm414 = vcmp.lt.f32.partialorder %v413, %v405
      %v415 = vsel %vm414, %v413, %v405
      %v416 = vsel %vm414, 8, %v406
      %v417 = vadd.f32 %v333, %v245
      %v418 = vstv %s201
      %v419 = vmul.f32 %v418, %v324
      %s420 = smul.f32 %s201, %s201
      %v421 = vstv %s420
      %v422 = vadd.f32 %v419, %v421
      %v423 = vadd.f32 %v417, %v422
      %vm424 = vcmp.lt.f32.partialorder %v423, %v415
      %v425 = vsel %vm424, %v423, %v415
      %v426 = vsel %vm424, 9, %v416
      %v427 = vadd.f32 %v333, %v248
      %v428 = vstv %s206
      %v429 = vmul.f32 %v428, %v324
      %s430 = smul.f32 %s206, %s206
      %v431 = vstv %s430
      %v432 = vadd.f32 %v429, %v431
      %v433 = vadd.f32 %v427, %v432
      %vm434 = vcmp.lt.f32.partialorder %v433, %v425
      %v435 = vsel %vm434, %v433, %v425
      %v436 = vsel %vm434, 10, %v426
      %v437 = vadd.f32 %v333, %v251
      %v438 = vstv %s211
      %v439 = vmul.f32 %v438, %v324
      %s440 = smul.f32 %s211, %s211
      %v441 = vstv %s440
      %v442 = vadd.f32 %v439, %v441
      %v443 = vadd.f32 %v437, %v442
      %vm444 = vcmp.lt.f32.partialorder %v443, %v435
      %v445 = vsel %vm444, %v443, %v435
      %v446 = vsel %vm444, 11, %v436
      %v447 = vadd.f32 %v333, %v254
      %v448 = vstv %s216
      %v449 = vmul.f32 %v448, %v324
      %s450 = smul.f32 %s216, %s216
      %v451 = vstv %s450
      %v452 = vadd.f32 %v449, %v451
      %v453 = vadd.f32 %v447, %v452
      %vm454 = vcmp.lt.f32.partialorder %v453, %v445
      %v455 = vsel %vm454, %v453, %v445
      %v456 = vsel %vm454, 12, %v446
      %v457 = vadd.f32 %v336, %v245
      %v458 = vstv %s221
      %v459 = vmul.f32 %v458, %v324
      %s460 = smul.f32 %s221, %s221
      %v461 = vstv %s460
      %v462 = vadd.f32 %v459, %v461
      %v463 = vadd.f32 %v457, %v462
      %vm464 = vcmp.lt.f32.partialorder %v463, %v455
      %v465 = vsel %vm464, %v463, %v455
      %v466 = vsel %vm464, 13, %v456
      %v467 = vadd.f32 %v336, %v248
      %v468 = vstv %s226
      %v469 = vmul.f32 %v468, %v324
      %s470 = smul.f32 %s226, %s226
      %v471 = vstv %s470
      %v472 = vadd.f32 %v469, %v471
      %v473 = vadd.f32 %v467, %v472
      %vm474 = vcmp.lt.f32.partialorder %v473, %v465
      %v475 = vsel %vm474, %v473, %v465
      %v476 = vsel %vm474, 14, %v466
      %v477 = vadd.f32 %v336, %v251
      %v478 = vstv %s231
      %v479 = vmul.f32 %v478, %v324
      %s480 = smul.f32 %s231, %s231
      %v481 = vstv %s480
      %v482 = vadd.f32 %v479, %v481
      %v483 = vadd.f32 %v477, %v482
      %vm484 = vcmp.lt.f32.partialorder %v483, %v475
      %v485 = vsel %vm484, %v483, %v475
      %v486 = vsel %vm484, 15, %v476
      %v487 = vadd.f32 %v336, %v254
      %v488 = vstv %s236
      %v489 = vmul.f32 %v488, %v324
      %s490 = smul.f32 %s236, %s236
      %v491 = vstv %s490
      %v492 = vadd.f32 %v489, %v491
      %v493 = vadd.f32 %v487, %v492
      %vm494 = vcmp.lt.f32.partialorder %v493, %v485
      %v495 = vsel %vm494, 16, %v486
      %vm496 = vcmp.ne.f32.partialorder %v314, 0.0
      %v497 = vsel %vm496, %v495, 0
      %vm498 = vcmp.eq.s32.totalorder %v497, 1
      %v499 = vsel %vm498, 1, 0
      %v500 = vcvt.s32.f32 %v499
      %vm501 = vcmp.eq.s32.totalorder %v497, 2
      %v502 = vsel %vm501, 1, 0
      %v503 = vcvt.s32.f32 %v502
      %vm504 = vcmp.eq.s32.totalorder %v497, 3
      %v505 = vsel %vm504, 1, 0
      %v506 = vcvt.s32.f32 %v505
      %vm507 = vcmp.eq.s32.totalorder %v497, 4
      %v508 = vsel %vm507, 1, 0
      %v509 = vcvt.s32.f32 %v508
      %vm510 = vcmp.eq.s32.totalorder %v497, 5
      %v511 = vsel %vm510, 1, 0
      %v512 = vcvt.s32.f32 %v511
      %vm513 = vcmp.eq.s32.totalorder %v497, 6
      %v514 = vsel %vm513, 1, 0
      %v515 = vcvt.s32.f32 %v514
      %vm516 = vcmp.eq.s32.totalorder %v497, 7
      %v517 = vsel %vm516, 1, 0
      %v518 = vcvt.s32.f32 %v517
      %vm519 = vcmp.eq.s32.totalorder %v497, 8
      %v520 = vsel %vm519, 1, 0
      %v521 = vcvt.s32.f32 %v520
      %vm522 = vcmp.eq.s32.totalorder %v497, 9
      %v523 = vsel %vm522, 1, 0
      %v524 = vcvt.s32.f32 %v523
      %vm525 = vcmp.eq.s32.totalorder %v497, 10
      %v526 = vsel %vm525, 1, 0
      %v527 = vcvt.s32.f32 %v526
      %vm528 = vcmp.eq.s32.totalorder %v497, 11
      %v529 = vsel %vm528, 1, 0
      %v530 = vcvt.s32.f32 %v529
      %vm531 = vcmp.eq.s32.totalorder %v497, 12
      %v532 = vsel %vm531, 1, 0
      %v533 = vcvt.s32.f32 %v532
      %vm534 = vcmp.eq.s32.totalorder %v497, 13
      %v535 = vsel %vm534, 1, 0
      %v536 = vcvt.s32.f32 %v535
      %vm537 = vcmp.eq.s32.totalorder %v497, 14
      %v538 = vsel %vm537, 1, 0
      %v539 = vcvt.s32.f32 %v538
      %vm540 = vcmp.eq.s32.totalorder %v497, 15
      %v541 = vsel %vm540, 1, 0
      %v542 = vcvt.s32.f32 %v541
      %vm543 = vcmp.eq.s32.totalorder %v497, 16
      %v544 = vsel %vm543, 1, 0
      %v545 = vcvt.s32.f32 %v544
      %v547 = vsel %vm38, %v500, 0
      %v550 = vsel %vm38, %v503, 0
      %v553 = vsel %vm38, %v506, 0
      %v556 = vsel %vm38, %v509, 0
      %v559 = vsel %vm38, %v512, 0
      %v562 = vsel %vm38, %v515, 0
      %v565 = vsel %vm38, %v518, 0
      %v568 = vsel %vm38, %v521, 0
      %v571 = vsel %vm38, %v524, 0
      %v574 = vsel %vm38, %v527, 0
      %v577 = vsel %vm38, %v530, 0
      %v580 = vsel %vm38, %v533, 0
      %v583 = vsel %vm38, %v536, 0
      %v586 = vsel %vm38, %v539, 0
      %v589 = vsel %vm38, %v542, 0
      %v592 = vsel %vm38, %v545, 0
      %594 = vmatpush.msra.mxu0 0.0
      %595 = vmatpush.msra.mxu0 0.0
      %596 = vmatpush.msra.mxu0 0.0
      %597 = vmatpush.msra.mxu0 0.0
      %598 = vmatpush.msra.mxu0 0.0
      %599 = vmatpush.msra.mxu0 0.0
      %600 = vmatpush.msra.mxu0 0.0
      %601 = vmatpush.msra.mxu0 0.0
      %602 = vmatpush.msra.mxu0 %v277
      %603 = vmatpush.msra.mxu0 %v276
      %604 = vmatpush.msra.mxu0 %v275
      %605 = vmatpush.msra.mxu0 %v274
      %606 = vmatpush.msra.mxu0 %v273
      %607 = vmatpush.msra.mxu0 %v272
      %608 = vmatpush.msra.mxu0 %v271
      %609 = vmatpush.msra.mxu0 %v270
      %610 = vmatmul.f32.gmra.mxu0 %v547
      %v611 = vpop.f32.mrf.mxu0
      %v612 = vadd.f32 0.0, %v611
      %613 = vmatmul.f32.gmra.mxu0 %v550
      %v614 = vpop.f32.mrf.mxu0
      %v615 = vadd.f32 0.0, %v614
      %616 = vmatmul.f32.gmra.mxu0 %v553
      %v617 = vpop.f32.mrf.mxu0
      %v618 = vadd.f32 0.0, %v617
      %619 = vmatmul.f32.gmra.mxu0 %v556
      %v620 = vpop.f32.mrf.mxu0
      %v621 = vadd.f32 0.0, %v620
      %622 = vmatmul.f32.gmra.mxu0 %v559
      %v623 = vpop.f32.mrf.mxu0
      %v624 = vadd.f32 0.0, %v623
      %625 = vmatmul.f32.gmra.mxu0 %v562
      %v626 = vpop.f32.mrf.mxu0
      %v627 = vadd.f32 0.0, %v626
      %628 = vmatmul.f32.gmra.mxu0 %v565
      %v629 = vpop.f32.mrf.mxu0
      %v630 = vadd.f32 0.0, %v629
      %631 = vmatmul.f32.gmra.mxu0 %v568
      %v632 = vpop.f32.mrf.mxu0
      %v633 = vadd.f32 0.0, %v632
      %634 = vmatmul.f32.gmra.mxu0 %v571
      %v635 = vpop.f32.mrf.mxu0
      %v636 = vadd.f32 0.0, %v635
      %637 = vmatmul.f32.gmra.mxu0 %v574
      %v638 = vpop.f32.mrf.mxu0
      %v639 = vadd.f32 0.0, %v638
      %640 = vmatmul.f32.gmra.mxu0 %v577
      %v641 = vpop.f32.mrf.mxu0
      %v642 = vadd.f32 0.0, %v641
      %643 = vmatmul.f32.gmra.mxu0 %v580
      %v644 = vpop.f32.mrf.mxu0
      %v645 = vadd.f32 0.0, %v644
      %646 = vmatmul.f32.gmra.mxu0 %v583
      %v647 = vpop.f32.mrf.mxu0
      %v648 = vadd.f32 0.0, %v647
      %649 = vmatmul.f32.gmra.mxu0 %v586
      %v650 = vpop.f32.mrf.mxu0
      %v651 = vadd.f32 0.0, %v650
      %652 = vmatmul.f32.gmra.mxu0 %v589
      %v653 = vpop.f32.mrf.mxu0
      %v654 = vadd.f32 0.0, %v653
      %655 = vmatmul.f32.gmra.mxu0 %v592
      %v656 = vpop.f32.mrf.mxu0
      %v657 = vadd.f32 0.0, %v656
      %658 = vdwg.mxu0
      %659 = vmatpush.msra.mxu0 %v657
      %660 = vmatpush.msra.mxu0 %v654
      %661 = vmatpush.msra.mxu0 %v651
      %662 = vmatpush.msra.mxu0 %v648
      %663 = vmatpush.msra.mxu0 %v645
      %664 = vmatpush.msra.mxu0 %v642
      %665 = vmatpush.msra.mxu0 %v639
      %666 = vmatpush.msra.mxu0 %v636
      %667 = vmatpush.msra.mxu0 %v633
      %668 = vmatpush.msra.mxu0 %v630
      %669 = vmatpush.msra.mxu0 %v627
      %670 = vmatpush.msra.mxu0 %v624
      %671 = vmatpush.msra.mxu0 %v621
      %672 = vmatpush.msra.mxu0 %v618
      %673 = vmatpush.msra.mxu0 %v615
      %674 = vmatpush.msra.mxu0 %v612
      %675 = vmatmul.f32.gmra.mxu0 %v292
      %v676 = vpop.f32.mrf.mxu0
      %v677 = vadd.f32 0.0, %v676
      %678 = vmatmul.f32.gmra.mxu0 %v293
      %v679 = vpop.f32.mrf.mxu0
      %v680 = vadd.f32 0.0, %v679
      %681 = vdwg.mxu0
      %682 = vmatpush.msra.mxu0 %v657
      %683 = vmatpush.msra.mxu0 %v654
      %684 = vmatpush.msra.mxu0 %v651
      %685 = vmatpush.msra.mxu0 %v648
      %686 = vmatpush.msra.mxu0 %v645
      %687 = vmatpush.msra.mxu0 %v642
      %688 = vmatpush.msra.mxu0 %v639
      %689 = vmatpush.msra.mxu0 %v636
      %690 = vmatpush.msra.mxu0 %v633
      %691 = vmatpush.msra.mxu0 %v630
      %692 = vmatpush.msra.mxu0 %v627
      %693 = vmatpush.msra.mxu0 %v624
      %694 = vmatpush.msra.mxu0 %v621
      %695 = vmatpush.msra.mxu0 %v618
      %696 = vmatpush.msra.mxu0 %v615
      %697 = vmatpush.msra.mxu0 %v612
      %698 = vmatmul.f32.gmra.mxu0 %v298
      %v699 = vpop.f32.mrf.mxu0
      %v700 = vadd.f32 0.0, %v699
      %701 = vmatmul.f32.gmra.mxu0 %v299
      %v702 = vpop.f32.mrf.mxu0
      %v703 = vadd.f32 0.0, %v702
      %704 = vdwg.mxu0
      %v705 = vadd.f32 %v306, %v677
      %v706 = vadd.f32 %v307, %v680
      %v707 = vadd.f32 %v310, %v677
      %v708 = vadd.f32 %v311, %v680
      %v709 = vadd.f32 %v308, %v700
      %v710 = vadd.f32 %v309, %v703
      %v711 = vmul.f32 %v316, %v677
      %v712 = vmul.f32 %v316, %v680
      %v713 = vadd.f32 %v709, %v711
      %v714 = vadd.f32 %v710, %v712
    $region18: #{run.1} parent=1 // loop_footer
      %s305 = sadd.s32 1, %s301
    $region19: #{run.1} parent=1 // loop_footer_branch
      %300 = sbr.rel target = $region15
    $region20: #{run.1} parent=1 // loop_exit
      _
    %v715 = vmax.f32 %v306, 1.0
    %v716 = vmax.f32 %v307, 1.0
    %v717 = vrcp.pop %v715
    %v718 = vmul.f32 %v715, %v717
    %v719 = vsub.f32 1.0, %v718
    %v720 = vmul.f32 %v717, %v719
    %v721 = vadd.f32 %v717, %v720
    %vm722 = vweird.f32 %v715
    %vm723 = vweird.f32 %v717
    %vm724 = vmor %vm722, %vm723
    %v725 = vsel %vm724, %v717, %v721
    %v726 = vand.u32 2147483647, %v715
    %vm727 = vcmp.eq.f32.partialorder %v726, 8.507059e+37
    %v728 = vand.u32 %v715, 2147483648
    %v729 = vor.u32 1.1754944e-38, %v728
    %v730 = vsel %vm727, %v729, %v725
    %v731 = vmul.f32 %v308, %v730
    %v732 = vrcp.pop %v716
    %v733 = vmul.f32 %v716, %v732
    %v734 = vsub.f32 1.0, %v733
    %v735 = vmul.f32 %v732, %v734
    %v736 = vadd.f32 %v732, %v735
    %vm737 = vweird.f32 %v716
    %vm738 = vweird.f32 %v732
    %vm739 = vmor %vm737, %vm738
    %v740 = vsel %vm739, %v732, %v736
    %v741 = vand.u32 2147483647, %v716
    %vm742 = vcmp.eq.f32.partialorder %v741, 8.507059e+37
    %v743 = vand.u32 %v716, 2147483648
    %v744 = vor.u32 1.1754944e-38, %v743
    %v745 = vsel %vm742, %v744, %v740
    %v746 = vmul.f32 %v309, %v745
    %v747 = vfloor.f32 %v731
    %v748 = vfloor.f32 %v746
    %751 = vrot.lane.b32.xlu0 %v715, 1
    %v752 = vpop.permute.xlu0 %751
    %753 = vrot.lane.b32.xlu0 %v716, 1
    %v754 = vpop.permute.xlu0 %753
    %v757 = vrcp.pop %v752
    %v758 = vmul.f32 %v752, %v757
    %v759 = vsub.f32 1.0, %v758
    %v760 = vmul.f32 %v757, %v759
    %v761 = vadd.f32 %v757, %v760
    %vm762 = vweird.f32 %v752
    %vm763 = vweird.f32 %v757
    %vm764 = vmor %vm762, %vm763
    %v765 = vsel %vm764, %v757, %v761
    %v766 = vand.u32 2147483647, %v752
    %vm767 = vcmp.eq.f32.partialorder %v766, 8.507059e+37
    %v768 = vand.u32 %v752, 2147483648
    %v769 = vor.u32 1.1754944e-38, %v768
    %v770 = vsel %vm767, %v769, %v765
    %v771 = vmul.f32 %v310, %v770
    %v772 = vrcp.pop %v754
    %v773 = vmul.f32 %v754, %v772
    %v774 = vsub.f32 1.0, %v773
    %v775 = vmul.f32 %v772, %v774
    %v776 = vadd.f32 %v772, %v775
    %vm777 = vweird.f32 %v754
    %vm778 = vweird.f32 %v772
    %vm779 = vmor %vm777, %vm778
    %v780 = vsel %vm779, %v772, %v776
    %v781 = vand.u32 2147483647, %v754
    %vm782 = vcmp.eq.f32.partialorder %v781, 8.507059e+37
    %v783 = vand.u32 %v754, 2147483648
    %v784 = vor.u32 1.1754944e-38, %v783
    %v785 = vsel %vm782, %v784, %v780
    %v786 = vmul.f32 %v311, %v785
    %v787 = vfloor.f32 %v771
    %v788 = vfloor.f32 %v786
    %v789 = vsub.f32 %v747, 5.0
    %v790 = vsub.f32 %v748, 5.0
    %792 = vset.pattern.permute.xlu0 0
    %793 = vperm.xlu0 %792, %v789
    %v794 = vpop.permute.xlu0 %793
    %797 = vset.pattern.permute.xlu0 0
    %798 = vperm.xlu0 %797, %v790
    %v799 = vpop.permute.xlu0 %798
    %vm801 = vcmp.ge.f32.partialorder %v239, %v794
    %vm802 = vcmp.ge.f32.partialorder %v239, %v799
    %v803 = vadd.f32 %v747, 5.0
    %v804 = vadd.f32 %v748, 5.0
    %806 = vset.pattern.permute.xlu0 0
    %807 = vperm.xlu0 %806, %v803
    %v808 = vpop.permute.xlu0 %807
    %811 = vset.pattern.permute.xlu0 0
    %812 = vperm.xlu0 %811, %v804
    %v813 = vpop.permute.xlu0 %812
    %vm815 = vcmp.lt.f32.partialorder %v239, %v808
    %vm816 = vcmp.lt.f32.partialorder %v239, %v813
    %vm817 = vmand %vm801, %vm815
    %vm818 = vmand %vm802, %vm816
    %v819 = vsel %vm817, 1, 0
    %v820 = vsel %vm818, 1, 0
    %v821 = vcvt.s32.f32 %v819
    %v822 = vcvt.s32.f32 %v820
    %v823 = vsub.f32 %v787, 5.0
    %v824 = vsub.f32 %v788, 5.0
    %826 = vset.pattern.permute.xlu0 1
    %827 = vperm.xlu0 %826, %v823
    %v828 = vpop.permute.xlu0 %827
    %831 = vset.pattern.permute.xlu0 1
    %832 = vperm.xlu0 %831, %v824
    %v833 = vpop.permute.xlu0 %832
    %vm835 = vcmp.ge.f32.partialorder %v239, %v828
    %vm836 = vcmp.ge.f32.partialorder %v239, %v833
    %v837 = vadd.f32 %v787, 5.0
    %v838 = vadd.f32 %v788, 5.0
    %840 = vset.pattern.permute.xlu0 1
    %841 = vperm.xlu0 %840, %v837
    %v842 = vpop.permute.xlu0 %841
    %845 = vset.pattern.permute.xlu0 1
    %846 = vperm.xlu0 %845, %v838
    %v847 = vpop.permute.xlu0 %846
    %vm849 = vcmp.lt.f32.partialorder %v239, %v842
    %vm850 = vcmp.lt.f32.partialorder %v239, %v847
    %vm851 = vmand %vm835, %vm849
    %vm852 = vmand %vm836, %vm850
    %v853 = vsel %vm851, 1, 0
    %v854 = vsel %vm852, 1, 0
    %v855 = vcvt.s32.f32 %v853
    %v856 = vcvt.s32.f32 %v854
    %v858 = vsel %vm38, %v821, 0
    %v861 = vsel %vm38, %v822, 0
    %863 = vmatpush.msra.mxu0 0.0
    %864 = vmatpush.msra.mxu0 0.0
    %865 = vmatpush.msra.mxu0 0.0
    %866 = vmatpush.msra.mxu0 0.0
    %867 = vmatpush.msra.mxu0 0.0
    %868 = vmatpush.msra.mxu0 0.0
    %869 = vmatpush.msra.mxu0 0.0
    %870 = vmatpush.msra.mxu0 0.0
    %871 = vmatpush.msra.mxu0 %v37
    %872 = vmatpush.msra.mxu0 %v36
    %873 = vmatpush.msra.mxu0 %v35
    %874 = vmatpush.msra.mxu0 %v34
    %875 = vmatpush.msra.mxu0 %v33
    %876 = vmatpush.msra.mxu0 %v32
    %877 = vmatpush.msra.mxu0 %v31
    %878 = vmatpush.msra.mxu0 %v30
    %879 = vmatmul.f32.gmra.mxu0 %v858
    %v880 = vpop.f32.mrf.mxu0
    %v881 = vadd.f32 0.0, %v880
    %882 = vmatmul.f32.gmra.mxu0 %v861
    %v883 = vpop.f32.mrf.mxu0
    %v884 = vadd.f32 0.0, %v883
    %885 = vdwg.mxu0
    %886 = vmatpush.msra.mxu0 0.0
    %887 = vmatpush.msra.mxu0 0.0
    %888 = vmatpush.msra.mxu0 0.0
    %889 = vmatpush.msra.mxu0 0.0
    %890 = vmatpush.msra.mxu0 0.0
    %891 = vmatpush.msra.mxu0 0.0
    %892 = vmatpush.msra.mxu0 0.0
    %893 = vmatpush.msra.mxu0 0.0
    %894 = vmatpush.msra.mxu0 %v128
    %895 = vmatpush.msra.mxu0 %v127
    %896 = vmatpush.msra.mxu0 %v126
    %897 = vmatpush.msra.mxu0 %v125
    %898 = vmatpush.msra.mxu0 %v124
    %899 = vmatpush.msra.mxu0 %v123
    %900 = vmatpush.msra.mxu0 %v122
    %901 = vmatpush.msra.mxu0 %v121
    %902 = vmatmul.f32.gmra.mxu0 %v858
    %v903 = vpop.f32.mrf.mxu0
    %v904 = vadd.f32 0.0, %v903
    %905 = vmatmul.f32.gmra.mxu0 %v861
    %v906 = vpop.f32.mrf.mxu0
    %v907 = vadd.f32 0.0, %v906
    %908 = vdwg.mxu0
    %v909 = vmul.f32 %v881, %v855
    %v910 = vmul.f32 %v884, %v856
    %v911 = vsel %vm38, %v909, 0.0
    %912 = vadd.xlane.f32.xlu0 %v911
    %v913 = vpop.xlane.xlu0 %912
    %v914 = vsel %vm38, %v910, 0.0
    %915 = vadd.xlane.f32.xlu0 %v914
    %v916 = vpop.xlane.xlu0 %915
    %v917 = vmul.f32 %v904, %v855
    %v918 = vmul.f32 %v907, %v856
    %v919 = vsel %vm38, %v917, 0.0
    %920 = vadd.xlane.f32.xlu0 %v919
    %v921 = vpop.xlane.xlu0 %920
    %v922 = vsel %vm38, %v918, 0.0
    %923 = vadd.xlane.f32.xlu0 %v922
    %v924 = vpop.xlane.xlu0 %923
    %vm925 = vcmp.gt.f32.partialorder %v913, 0.0
    %vm926 = vcmp.gt.f32.partialorder %v916, 0.0
    %v927 = vmax.f32 %v921, 1.0
    %v928 = vmax.f32 %v924, 1.0
    %v929 = vrcp.pop %v927
    %v930 = vmul.f32 %v927, %v929
    %v931 = vsub.f32 1.0, %v930
    %v932 = vmul.f32 %v929, %v931
    %v933 = vadd.f32 %v929, %v932
    %vm934 = vweird.f32 %v927
    %vm935 = vweird.f32 %v929
    %vm936 = vmor %vm934, %vm935
    %v937 = vsel %vm936, %v929, %v933
    %v938 = vand.u32 2147483647, %v927
    %vm939 = vcmp.eq.f32.partialorder %v938, 8.507059e+37
    %v940 = vand.u32 %v927, 2147483648
    %v941 = vor.u32 1.1754944e-38, %v940
    %v942 = vsel %vm939, %v941, %v937
    %v943 = vmul.f32 %v913, %v942
    %v944 = vrcp.pop %v928
    %v945 = vmul.f32 %v928, %v944
    %v946 = vsub.f32 1.0, %v945
    %v947 = vmul.f32 %v944, %v946
    %v948 = vadd.f32 %v944, %v947
    %vm949 = vweird.f32 %v928
    %vm950 = vweird.f32 %v944
    %vm951 = vmor %vm949, %vm950
    %v952 = vsel %vm951, %v944, %v948
    %v953 = vand.u32 2147483647, %v928
    %vm954 = vcmp.eq.f32.partialorder %v953, 8.507059e+37
    %v955 = vand.u32 %v928, 2147483648
    %v956 = vor.u32 1.1754944e-38, %v955
    %v957 = vsel %vm954, %v956, %v952
    %v958 = vmul.f32 %v916, %v957
    %v959 = vsel %vm925, %v943, 0.0
    %v960 = vsel %vm926, %v958, 0.0
    %v961 = vadd.f32 %v306, 0.5
    %v962 = vadd.f32 %v307, 0.5
    %v963 = vfloor.f32 %v961
    %v964 = vfloor.f32 %v962
    %v965 = vcvt.f32.s32.to.zero.pseudo %v963
    %v966 = vcvt.f32.s32.to.zero.pseudo %v964
    %vm967 = vcmask 7168
    %968 = vst.msk [vmem:[%s3] sm:$0xff] %vm967, %v965
    %969 = vst.msk [vmem:[%s3 + $0x8] sm:$0xff] %vm967, %v966
    %v970 = vcvt.f32.s32.to.zero.pseudo %v747
    %v971 = vcvt.f32.s32.to.zero.pseudo %v748
    %972 = vst.msk [vmem:[%s4] sm:$0xff] %vm967, %v970
    %973 = vst.msk [vmem:[%s4 + $0x8] sm:$0xff] %vm967, %v971
    %v974 = vcvt.f32.s32.to.zero.pseudo %v787
    %v975 = vcvt.f32.s32.to.zero.pseudo %v788
    %976 = vrot.lane.b32.xlu0 %v974, 127
    %v977 = vpop.permute.xlu0 %976
    %978 = vrot.lane.b32.xlu0 %v975, 127
    %v979 = vpop.permute.xlu0 %978
    %980 = vst.msk [vmem:[%s5] sm:$0xff] %vm967, %v977
    %981 = vst.msk [vmem:[%s5 + $0x8] sm:$0xff] %vm967, %v979
    %982 = vst.msk [vmem:[%s6] sm:$0xff] %vm967, %v959
    %983 = vst.msk [vmem:[%s6 + $0x8] sm:$0xff] %vm967, %v960
    // Predicated region
    $region21: #{run.1} parent=1 // pred_check
      _
    $region22: #{run.1} parent=1 // pred_check_branch
      %985 = sbr.rel (0) target = $region24
    $region23: #{run.1} parent=1 // pred_region
      %987 = vsyncadd [#allocation3], 0
      %s989 = sshll.u32 [#allocation5], 4
      %s990 = int_to_ptr.vmem [resolvable:$true] %s989
      %s991 = sshll.u32 %s2, 4
      %s992 = int_to_ptr.hbm [resolvable:$true] %s991
      %994 = dma.vmem_to_hbm [thread:$0]  %s990, 16, %s992, [#allocation3]
    $region24: #{run.1} parent=1 // pred_fallthru
      _
    // Predicated region
    $region25: #{run.1} parent=1 // pred_check
      _
    $region26: #{run.1} parent=1 // pred_check_branch
      %996 = sbr.rel (0) target = $region28
    $region27: #{run.1} parent=1 // pred_region
      _
    $region28: #{run.1} parent=1 // pred_fallthru
      _
    // Predicated region
    $region29: #{run.1} parent=1 // pred_check
      _
    $region30: #{run.1} parent=1 // pred_check_branch
      %998 = sbr.rel (0) target = $region32
    $region31: #{run.1} parent=1 // pred_region
      _
    $region32: #{run.1} parent=1 // pred_fallthru
      _
    // Predicated region
    $region33: #{run.1} parent=1 // pred_check
      _
    $region34: #{run.1} parent=1 // pred_check_branch
      %1000 = sbr.rel (0) target = $region36
    $region35: #{run.1} parent=1 // pred_region
      _
    $region36: #{run.1} parent=1 // pred_fallthru
      _
    // Predicated region
    $region37: #{run.1} parent=1 // pred_check
      _
    $region38: #{run.1} parent=1 // pred_check_branch
      %1002 = sbr.rel (0) target = $region40
    $region39: #{run.1} parent=1 // pred_region
      _
    $region40: #{run.1} parent=1 // pred_fallthru
      _
    // Predicated region
    $region41: #{run.1} parent=1 // pred_check
      _
    $region42: #{run.1} parent=1 // pred_check_branch
      %1004 = sbr.rel (0) target = $region44
    $region43: #{run.1} parent=1 // pred_region
      %1006 = dma.done [#allocation3], 16
    $region44: #{run.1} parent=1 // pred_fallthru
      _
    // Predicated region
    $region45: #{run.1} parent=1 // pred_check
      _
    $region46: #{run.1} parent=1 // pred_check_branch
      %1008 = sbr.rel (0) target = $region48
    $region47: #{run.1} parent=1 // pred_region
      _
    $region48: #{run.1} parent=1 // pred_fallthru
      _
    // Predicated region
    $region49: #{run.1} parent=1 // pred_check
      _
    $region50: #{run.1} parent=1 // pred_check_branch
      %1010 = sbr.rel (0) target = $region52
    $region51: #{run.1} parent=1 // pred_region
      _
    $region52: #{run.1} parent=1 // pred_fallthru
      _
    // Predicated region
    $region53: #{run.1} parent=1 // pred_check
      _
    $region54: #{run.1} parent=1 // pred_check_branch
      %1012 = sbr.rel (0) target = $region56
    $region55: #{run.1} parent=1 // pred_region
      _
    $region56: #{run.1} parent=1 // pred_fallthru
      _
    // Predicated region
    $region57: #{run.1} parent=1 // pred_check
      _
    $region58: #{run.1} parent=1 // pred_check_branch
      %1014 = sbr.rel (0) target = $region60
    $region59: #{run.1} parent=1 // pred_region
      _
    $region60: #{run.1} parent=1 // pred_fallthru
      _
    %1015 = vsyncpa [#allocation3], 1
    %1016 = vsyncpa [#allocation4], 1

</llo_original>
